<compile_context>
chip_gen: v7x
topology: tpu7x:2x2x1
jax: 0.10.0
libtpu: 0.0.40
codegen_flags: <defaults>
</compile_context>

<pallas_src>
import functools

import jax
import jax.numpy as jnp
from jax import lax
from jax.experimental import pallas as pl
from jax.experimental.pallas import tpu as pltpu  # noqa: F401


def _stack_rows(rows, n_lanes):
    """Pack k (1, N) rows into one (k, N) tile using VALU selects so the result
    can be written with a single full-tile (unmasked) store."""
    k = len(rows)
    ridx = lax.broadcasted_iota(jnp.int32, (k, n_lanes), 0)
    out = jnp.broadcast_to(rows[0], (k, n_lanes))
    for r in range(1, k):
        out = jnp.where(ridx == r, jnp.broadcast_to(rows[r], (k, n_lanes)), out)
    return out


def _mpm_kernel(x_ref, v_ref, C_ref, F_ref, mat_ref, Jp_ref,
                x_out, v_out, C_out, F_out, Jp_out,
                *, n_grid, dx, dt, p_vol, p_mass, mu_0, lambda_0, num_steps):
    f32 = jnp.float32
    inv_dx = float(n_grid)
    N = x_ref.shape[1]

    # material masks are step-invariant
    mat = mat_ref[0:1, :]
    is_liq = mat == 0
    is_jel = mat == 1
    is_snow = mat == 2

    # step-invariant grid-node tiles (hoisted out of the step loop)
    gi = lax.broadcasted_iota(jnp.int32, (n_grid, n_grid), 0)
    gj = lax.broadcasted_iota(jnp.int32, (n_grid, n_grid), 1)
    gxi = gi.astype(f32) * dx
    gxj = gj.astype(f32) * dx
    rows = lax.broadcasted_iota(jnp.int32, (n_grid, 1), 0)
    icol = lax.broadcasted_iota(jnp.int32, (n_grid, N), 0).astype(f32) * dx

    def step(state):
        (x0, x1, v0, v1, C00, C01, C10, C11,
         F00, F01, F10, F11, Jp) = state

        # ---- quadratic B-spline stencil + separable one-hot factors ---------
        bi = (x0 * inv_dx - 0.5).astype(jnp.int32)   # trunc == .int() (x > 0)
        bj = (x1 * inv_dx - 0.5).astype(jnp.int32)
        fxi = x0 * inv_dx - bi.astype(f32)
        fxj = x1 * inv_dx - bj.astype(f32)
        wi = [0.5 * (1.5 - fxi) ** 2, 0.75 - (fxi - 1.0) ** 2, 0.5 * (fxi - 0.5) ** 2]
        wj = [0.5 * (1.5 - fxj) ** 2, 0.75 - (fxj - 1.0) ** 2, 0.5 * (fxj - 0.5) ** 2]
        Wi = jnp.zeros((n_grid, N), f32)
        Wj = jnp.zeros((n_grid, N), f32)
        for di in range(3):
            Wi = Wi + jnp.where((bi + di) == rows, wi[di], 0.0)
            Wj = Wj + jnp.where((bj + di) == rows, wj[di], 0.0)
        # TODO(synk): stencil nodes outside [0, n_grid) match no row of Wi/Wj
        # and are dropped (differs from the reference only for particles that
        # reach the outer cells; the BCs keep them away in practice).

        # ---- F <- F + dt * C @ F  (2x2, unrolled) ----------------------------
        Fn00 = F00 + dt * (C00 * F00 + C01 * F10)
        Fn01 = F01 + dt * (C00 * F01 + C01 * F11)
        Fn10 = F10 + dt * (C10 * F00 + C11 * F10)
        Fn11 = F11 + dt * (C10 * F01 + C11 * F11)

        # hardening
        h = jnp.exp(10.0 * (1.0 - Jp))
        h = jnp.where(is_jel, 0.3, h)
        mu = jnp.where(is_liq, 0.0, mu_0 * h)
        lam = lambda_0 * h

        # ---- closed-form batched 2x2 SVD:  Fn = U diag(sig) Vh ---------------
        # TODO(synk): inverted / near-degenerate F may pick the opposite
        # rotation sign vs. the reference svd3x3 convention (R = U Vh stays a
        # rotation for the well-conditioned F seen here).
        a, b, c, d = Fn00, Fn01, Fn10, Fn11
        sp = a * a + c * c
        sq = a * b + c * d
        sr = b * b + d * d
        tr = sp + sr
        diff = sp - sr
        disc = jnp.sqrt(diff * diff + 4.0 * sq * sq)
        eps = 1e-12
        sig1 = jnp.sqrt(jnp.maximum(0.5 * (tr + disc), 0.0))
        sig2 = jnp.sqrt(jnp.maximum(0.5 * (tr - disc), 0.0))
        disc_safe = jnp.maximum(disc, eps)
        c2t = jnp.where(disc > eps, diff / disc_safe, 1.0)
        s2t = jnp.where(disc > eps, 2.0 * sq / disc_safe, 0.0)
        ct = jnp.sqrt(jnp.maximum(0.5 * (1.0 + c2t), 0.0))
        st_ = jnp.where(ct > 1e-6, s2t / (2.0 * jnp.maximum(ct, 1e-6)), 1.0)
        # V = [[ct, -st], [st, ct]]  ->  Vh = [[ct, st], [-st, ct]]
        inv_s1 = 1.0 / jnp.maximum(sig1, eps)
        inv_s2 = 1.0 / jnp.maximum(sig2, eps)
        U00 = (a * ct + b * st_) * inv_s1
        U10 = (c * ct + d * st_) * inv_s1
        U01 = (b * ct - a * st_) * inv_s2
        U11 = (d * ct - c * st_) * inv_s2

        # snow plasticity
        s1c = jnp.clip(sig1, 1.0 - 2.5e-2, 1.0 + 4.5e-3)
        s2c = jnp.clip(sig2, 1.0 - 2.5e-2, 1.0 + 4.5e-3)
        Jp_new = jnp.where(is_snow, Jp * (sig1 / s1c) * (sig2 / s2c), Jp)
        sig1 = jnp.where(is_snow, s1c, sig1)
        sig2 = jnp.where(is_snow, s2c, sig2)
        J = sig1 * sig2

        # material-dependent F reconstruction (Fs = U diag(sig) Vh)
        sqrtJ = jnp.sqrt(J)
        Fs00 = U00 * sig1 * ct - U01 * sig2 * st_
        Fs01 = U00 * sig1 * st_ + U01 * sig2 * ct
        Fs10 = U10 * sig1 * ct - U11 * sig2 * st_
        Fs11 = U10 * sig1 * st_ + U11 * sig2 * ct
        Fo00 = jnp.where(is_liq, sqrtJ, jnp.where(is_snow, Fs00, Fn00))
        Fo01 = jnp.where(is_liq, 0.0, jnp.where(is_snow, Fs01, Fn01))
        Fo10 = jnp.where(is_liq, 0.0, jnp.where(is_snow, Fs10, Fn10))
        Fo11 = jnp.where(is_liq, sqrtJ, jnp.where(is_snow, Fs11, Fn11))

        # stress folded straight into the affine matrix A = stress + p_mass*C
        # (R = U Vh consumed immediately -> short live ranges, U/Vh die here)
        D00 = Fo00 - (U00 * ct - U01 * st_)
        D01 = Fo01 - (U00 * st_ + U01 * ct)
        D10 = Fo10 - (U10 * ct - U11 * st_)
        D11 = Fo11 - (U10 * st_ + U11 * ct)
        lamJ = lam * J * (J - 1.0)
        sc = -dt * p_vol * 4.0 * inv_dx * inv_dx
        A00 = sc * (2.0 * mu * (D00 * Fo00 + D01 * Fo01) + lamJ) + p_mass * C00
        A01 = sc * (2.0 * mu * (D00 * Fo10 + D01 * Fo11)) + p_mass * C01
        A10 = sc * (2.0 * mu * (D10 * Fo00 + D11 * Fo01)) + p_mass * C10
        A11 = sc * (2.0 * mu * (D10 * Fo10 + D11 * Fo11) + lamJ) + p_mass * C11

        vadd0 = p_mass * v0 - (A00 * x0 + A01 * x1)
        vadd1 = p_mass * v1 - (A10 * x0 + A11 * x1)

        # ---- P2G: ALL 7 channels in ONE MXU contraction ----------------------
        # L[c*n_grid + i, p] = Wi[i,p]*channel_c[p];  G = L @ Wj^T
        L = jnp.concatenate(
            [Wi * vadd0, Wi * vadd1, Wi * A00, Wi * A01, Wi * A10, Wi * A11, Wi],
            axis=0)                                          # (7*n_grid, N)
        G = lax.dot_general(L, Wj, (((1,), (1,)), ((), ())),
                            preferred_element_type=f32)      # (7*n_grid, n_grid)
        gv0 = G[0 * n_grid:1 * n_grid]
        gv1 = G[1 * n_grid:2 * n_grid]
        ga00 = G[2 * n_grid:3 * n_grid]
        ga01 = G[3 * n_grid:4 * n_grid]
        ga10 = G[4 * n_grid:5 * n_grid]
        ga11 = G[5 * n_grid:6 * n_grid]
        gm = p_mass * G[6 * n_grid:7 * n_grid]

        # grid_v += grid_affine @ grid_x
        gv0 = gv0 + ga00 * gxi + ga01 * gxj
        gv1 = gv1 + ga10 * gxi + ga11 * gxj

        # momentum -> velocity on non-empty nodes
        nonempty = gm > 0.0
        inv_m = 1.0 / jnp.where(nonempty, gm, 1.0)
        gv0 = jnp.where(nonempty, gv0 * inv_m, gv0)
        gv1 = jnp.where(nonempty, gv1 * inv_m, gv1)

        # gravity
        gv1 = gv1 - dt * 50.0

        # boundary conditions
        gv0 = jnp.where(gi < 3, jnp.maximum(gv0, 0.0), gv0)
        gv0 = jnp.where(gi >= n_grid - 2, jnp.minimum(gv0, 0.0), gv0)
        gv1 = jnp.where(gj < 3, jnp.maximum(gv1, 0.0), gv1)
        gv1 = jnp.where(gj >= n_grid - 2, jnp.minimum(gv1, 0.0), gv1)

        # ---- G2P: ALL 4 j-contractions in ONE MXU call, i via XLU reduce -----
        GV = jnp.concatenate([gv0, gv1, gv0 * gxj, gv1 * gxj], axis=0)  # (4*n_grid, n_grid)
        T = lax.dot_general(GV, Wj, (((1,), (0,)), ((), ())),
                            preferred_element_type=f32)                # (4*n_grid, N)
        T0 = T[0 * n_grid:1 * n_grid]
        T1 = T[1 * n_grid:2 * n_grid]
        T0x = T[2 * n_grid:3 * n_grid]
        T1x = T[3 * n_grid:4 * n_grid]

        WiX = Wi * icol                                   # Wi[i,p] * (i*dx)
        nv0 = jnp.sum(Wi * T0, axis=0, keepdims=True)
        nv1 = jnp.sum(Wi * T1, axis=0, keepdims=True)
        s00 = jnp.sum(WiX * T0, axis=0, keepdims=True)    # sum W * gv0 * (i*dx)
        s01 = jnp.sum(Wi * T0x, axis=0, keepdims=True)    # sum W * gv0 * (j*dx)
        s10 = jnp.sum(WiX * T1, axis=0, keepdims=True)
        s11 = jnp.sum(Wi * T1x, axis=0, keepdims=True)

        k4 = 4.0 * inv_dx * inv_dx
        nC00 = (s00 - nv0 * x0) * k4
        nC01 = (s01 - nv0 * x1) * k4
        nC10 = (s10 - nv1 * x0) * k4
        nC11 = (s11 - nv1 * x1) * k4
        nx0 = x0 + dt * nv0
        nx1 = x1 + dt * nv1

        return (nx0, nx1, nv0, nv1, nC00, nC01, nC10, nC11,
                Fo00, Fo01, Fo10, Fo11, Jp_new)

    # initial per-particle rows (read everything before any aliased output write)
    state = (x_ref[0:1, :], x_ref[1:2, :], v_ref[0:1, :], v_ref[1:2, :],
             C_ref[0:1, :], C_ref[1:2, :], C_ref[2:3, :], C_ref[3:4, :],
             F_ref[0:1, :], F_ref[1:2, :], F_ref[2:3, :], F_ref[3:4, :],
             Jp_ref[0:1, :])

    if num_steps == 1:
        state = step(state)
    else:
        # multi-step: state stays resident in vregs/VMEM, no HBM round-trip
        state = lax.fori_loop(0, num_steps, lambda _, s: step(s), state)

    (nx0, nx1, nv0, nv1, nC00, nC01, nC10, nC11,
     Fo00, Fo01, Fo10, Fo11, Jp_new) = state

    # ---- 5 full-tile output stores ------------------------------------------
    x_out[...] = _stack_rows([nx0, nx1], N)
    v_out[...] = _stack_rows([nv0, nv1], N)
    C_out[...] = _stack_rows([nC00, nC01, nC10, nC11], N)
    F_out[...] = _stack_rows([Fo00, Fo01, Fo10, Fo11], N)
    Jp_out[...] = Jp_new


def mpm_step(x, v, C, F, material, Jp, *, n_grid, dx, dt, p_vol, p_rho,
             E, nu, mu_0, lambda_0, num_steps=1):
    """num_steps MPMModel.forward steps fused in one pallas_call.
    Returns (x, v, C, F, material, Jp) in the module's layout."""
    del E, nu  # folded into mu_0 / lambda_0 (kept for interface parity)
    N = x.shape[0]
    p_mass = p_vol * p_rho

    x_t = jnp.asarray(x, jnp.float32).T                     # (2, N)
    v_t = jnp.asarray(v, jnp.float32).T                     # (2, N)
    C_t = jnp.asarray(C, jnp.float32).reshape(N, 4).T       # (4, N)
    F_t = jnp.asarray(F, jnp.float32).reshape(N, 4).T       # (4, N)
    mat_t = jnp.asarray(material, jnp.int32).reshape(1, N)  # (1, N)
    Jp_t = jnp.asarray(Jp, jnp.float32).reshape(1, N)       # (1, N)

    kernel = functools.partial(
        _mpm_kernel, n_grid=n_grid, dx=float(dx), dt=float(dt),
        p_vol=float(p_vol), p_mass=float(p_mass),
        mu_0=float(mu_0), lambda_0=float(lambda_0), num_steps=int(num_steps))

    def spec(shape):
        return pl.BlockSpec(shape, lambda i: (0,) * len(shape))

    out_shape = (
        jax.ShapeDtypeStruct((2, N), jnp.float32),   # x
        jax.ShapeDtypeStruct((2, N), jnp.float32),   # v
        jax.ShapeDtypeStruct((4, N), jnp.float32),   # C
        jax.ShapeDtypeStruct((4, N), jnp.float32),   # F
        jax.ShapeDtypeStruct((1, N), jnp.float32),   # Jp
    )
    cost = pl.CostEstimate(
        # per step: 1 MXU pass (7*n_grid x N x n_grid) + 1 (4*n_grid x n_grid x N)
        flops=int(num_steps) * (2 * 11 * n_grid * n_grid * N + 300 * N),
        transcendentals=int(num_steps) * 8 * N,
        bytes_accessed=(14 + 13) * N * 4,
    )
    xo, vo, Co, Fo, Jpo = pl.pallas_call(
        kernel,
        grid=(1,),
        in_specs=[spec((2, N)), spec((2, N)), spec((4, N)), spec((4, N)),
                  spec((1, N)), spec((1, N))],
        out_specs=(spec((2, N)), spec((2, N)), spec((4, N)), spec((4, N)),
                   spec((1, N))),
        out_shape=out_shape,
        # donate the (transposed) state buffers onto the outputs
        input_output_aliases={0: 0, 1: 1, 2: 2, 3: 3, 5: 4},
        cost_estimate=cost,
    )(x_t, v_t, C_t, F_t, mat_t, Jp_t)

    return (xo.T, vo.T, Co.T.reshape(N, 2, 2), Fo.T.reshape(N, 2, 2),
            jnp.asarray(material), Jpo.reshape(N))


if __name__ == "__main__":
    # module hyper-parameters (deterministic, in-script)
    n_dim = 2
    n_particles = 128
    n_grid = 16
    dx = 1.0 / n_grid
    dt = 1e-4
    p_vol = (dx * 0.5) ** 2
    p_rho = 1.0
    E = 1000.0
    nu = 0.2
    mu_0 = E / (2.0 * (1.0 + nu))
    lambda_0 = E * nu / ((1.0 + nu) * (1.0 - 2.0 * nu))

    key = jax.random.PRNGKey(0)
    k1, k2, k3, k4, k5, k6 = jax.random.split(key, 6)
    x = jax.random.uniform(k1, (n_particles, 2), jnp.float32, 0.3, 0.7)
    v = 0.5 * jax.random.normal(k2, (n_particles, 2), dtype=jnp.float32)
    C = 0.1 * jax.random.normal(k3, (n_particles, 2, 2), dtype=jnp.float32)
    F = (jnp.tile(jnp.eye(2, dtype=jnp.float32)[None], (n_particles, 1, 1))
         + 0.01 * jax.random.normal(k4, (n_particles, 2, 2), dtype=jnp.float32))
    material = jax.random.randint(k5, (n_particles,), 0, 3, dtype=jnp.int32)
    Jp = 1.0 + 0.01 * jax.random.normal(k6, (n_particles,), dtype=jnp.float32)

    hyper = dict(n_grid=n_grid, dx=dx, dt=dt, p_vol=p_vol, p_rho=p_rho,
                 E=E, nu=nu, mu_0=mu_0, lambda_0=lambda_0)

    # one forward step (== MPMModel.forward); whole wrapper jitted so layout
    # transposes + the pallas_call dispatch as a single executable
    step1 = jax.jit(functools.partial(mpm_step, num_steps=1, **hyper))
    outs = jax.block_until_ready(step1(x, v, C, F, material, Jp))

    for o in outs:
        assert bool(jnp.all(jnp.isfinite(o.astype(jnp.float32)))), "non-finite output"
    assert outs[0].shape == (n_particles, 2)
    assert outs[1].shape == (n_particles, 2)
    assert outs[2].shape == (n_particles, 2, 2)
    assert outs[3].shape == (n_particles, 2, 2)
    assert outs[5].shape == (n_particles,)

    # fused multi-step path: 8 sub-steps per dispatch, state stays in VMEM
    step8 = jax.jit(functools.partial(mpm_step, num_steps=8, **hyper))
    outs8 = jax.block_until_ready(step8(x, v, C, F, material, Jp))
    for o in outs8:
        assert bool(jnp.all(jnp.isfinite(o.astype(jnp.float32)))), "non-finite fused output"

    print("KERNEL_OK")
</pallas_src>

<mosaic_0001>
module attributes {stable_mosaic.version = 11 : i64} {
  func.func @_mpm_kernel(%arg0: i32, %arg1: memref<2x128xf32, #tpu.memory_space<vmem>>, %arg2: memref<2x128xf32, #tpu.memory_space<vmem>>, %arg3: memref<4x128xf32, #tpu.memory_space<vmem>>, %arg4: memref<4x128xf32, #tpu.memory_space<vmem>>, %arg5: memref<1x128xi32, #tpu.memory_space<vmem>>, %arg6: memref<1x128xf32, #tpu.memory_space<vmem>>, %arg7: memref<2x128xf32, #tpu.memory_space<vmem>>, %arg8: memref<2x128xf32, #tpu.memory_space<vmem>>, %arg9: memref<4x128xf32, #tpu.memory_space<vmem>>, %arg10: memref<4x128xf32, #tpu.memory_space<vmem>>, %arg11: memref<1x128xf32, #tpu.memory_space<vmem>>) attributes {dimension_semantics = [#tpu.dimension_semantics<arbitrary>], iteration_bounds = array<i64: 1>, scalar_prefetch = 0 : i64, scratch_operands = 0 : i64, tpu.core_type = #tpu.core_type<tc>, window_params = [{pipeline_mode = #tpu.pipeline_mode<synchronous>, transform_indices = @transform_0, window_bounds = array<i64: 2, 128>}, {pipeline_mode = #tpu.pipeline_mode<synchronous>, transform_indices = @transform_1, window_bounds = array<i64: 2, 128>}, {pipeline_mode = #tpu.pipeline_mode<synchronous>, transform_indices = @transform_2, window_bounds = array<i64: 4, 128>}, {pipeline_mode = #tpu.pipeline_mode<synchronous>, transform_indices = @transform_3, window_bounds = array<i64: 4, 128>}, {pipeline_mode = #tpu.pipeline_mode<synchronous>, transform_indices = @transform_4, window_bounds = array<i64: 1, 128>}, {pipeline_mode = #tpu.pipeline_mode<synchronous>, transform_indices = @transform_5, window_bounds = array<i64: 1, 128>}, {pipeline_mode = #tpu.pipeline_mode<synchronous>, transform_indices = @transform_6, window_bounds = array<i64: 2, 128>}, {pipeline_mode = #tpu.pipeline_mode<synchronous>, transform_indices = @transform_7, window_bounds = array<i64: 2, 128>}, {pipeline_mode = #tpu.pipeline_mode<synchronous>, transform_indices = @transform_8, window_bounds = array<i64: 4, 128>}, {pipeline_mode = #tpu.pipeline_mode<synchronous>, transform_indices = @transform_9, window_bounds = array<i64: 4, 128>}, {pipeline_mode = #tpu.pipeline_mode<synchronous>, transform_indices = @transform_10, window_bounds = array<i64: 1, 128>}]} {
    %c0 = arith.constant 0 : index
    %c0_0 = arith.constant 0 : index
    %0 = vector.load %arg5[%c0, %c0_0] : memref<1x128xi32, #tpu.memory_space<vmem>>, vector<1x128xi32>
    %c0_i32 = arith.constant 0 : i32
    %1 = vector.broadcast %c0_i32 : i32 to vector<1x128xi32>
    %2 = arith.cmpi eq, %0, %1 : vector<1x128xi32>
    %c1_i32 = arith.constant 1 : i32
    %3 = vector.broadcast %c1_i32 : i32 to vector<1x128xi32>
    %4 = arith.cmpi eq, %0, %3 : vector<1x128xi32>
    %c2_i32 = arith.constant 2 : i32
    %5 = vector.broadcast %c2_i32 : i32 to vector<1x128xi32>
    %6 = arith.cmpi eq, %0, %5 : vector<1x128xi32>
    %7 = tpu.iota {dimensions = array<i32: 0>} : vector<16x16xi32>
    %8 = tpu.iota {dimensions = array<i32: 1>} : vector<16x16xi32>
    %9 = arith.sitofp %7 : vector<16x16xi32> to vector<16x16xf32>
    %cst = arith.constant 6.250000e-02 : f32
    %10 = vector.broadcast %cst : f32 to vector<16x16xf32>
    %11 = arith.mulf %9, %10 : vector<16x16xf32>
    %12 = arith.sitofp %8 : vector<16x16xi32> to vector<16x16xf32>
    %cst_1 = arith.constant 6.250000e-02 : f32
    %13 = vector.broadcast %cst_1 : f32 to vector<16x16xf32>
    %14 = arith.mulf %12, %13 : vector<16x16xf32>
    %15 = tpu.iota {dimensions = array<i32: 0>} : vector<16x1xi32>
    %16 = tpu.iota {dimensions = array<i32: 0>} : vector<16x128xi32>
    %17 = arith.sitofp %16 : vector<16x128xi32> to vector<16x128xf32>
    %cst_2 = arith.constant 6.250000e-02 : f32
    %18 = vector.broadcast %cst_2 : f32 to vector<16x128xf32>
    %19 = arith.mulf %17, %18 : vector<16x128xf32>
    %c0_3 = arith.constant 0 : index
    %c0_4 = arith.constant 0 : index
    %20 = vector.load %arg1[%c0_3, %c0_4] : memref<2x128xf32, #tpu.memory_space<vmem>>, vector<1x128xf32>
    %c1 = arith.constant 1 : index
    %c0_5 = arith.constant 0 : index
    %21 = vector.load %arg1[%c1, %c0_5] : memref<2x128xf32, #tpu.memory_space<vmem>>, vector<1x128xf32>
    %c0_6 = arith.constant 0 : index
    %c0_7 = arith.constant 0 : index
    %22 = vector.load %arg2[%c0_6, %c0_7] : memref<2x128xf32, #tpu.memory_space<vmem>>, vector<1x128xf32>
    %c1_8 = arith.constant 1 : index
    %c0_9 = arith.constant 0 : index
    %23 = vector.load %arg2[%c1_8, %c0_9] : memref<2x128xf32, #tpu.memory_space<vmem>>, vector<1x128xf32>
    %c0_10 = arith.constant 0 : index
    %c0_11 = arith.constant 0 : index
    %24 = vector.load %arg3[%c0_10, %c0_11] : memref<4x128xf32, #tpu.memory_space<vmem>>, vector<1x128xf32>
    %c1_12 = arith.constant 1 : index
    %c0_13 = arith.constant 0 : index
    %25 = vector.load %arg3[%c1_12, %c0_13] : memref<4x128xf32, #tpu.memory_space<vmem>>, vector<1x128xf32>
    %c2 = arith.constant 2 : index
    %c0_14 = arith.constant 0 : index
    %26 = vector.load %arg3[%c2, %c0_14] : memref<4x128xf32, #tpu.memory_space<vmem>>, vector<1x128xf32>
    %c3 = arith.constant 3 : index
    %c0_15 = arith.constant 0 : index
    %27 = vector.load %arg3[%c3, %c0_15] : memref<4x128xf32, #tpu.memory_space<vmem>>, vector<1x128xf32>
    %c0_16 = arith.constant 0 : index
    %c0_17 = arith.constant 0 : index
    %28 = vector.load %arg4[%c0_16, %c0_17] : memref<4x128xf32, #tpu.memory_space<vmem>>, vector<1x128xf32>
    %c1_18 = arith.constant 1 : index
    %c0_19 = arith.constant 0 : index
    %29 = vector.load %arg4[%c1_18, %c0_19] : memref<4x128xf32, #tpu.memory_space<vmem>>, vector<1x128xf32>
    %c2_20 = arith.constant 2 : index
    %c0_21 = arith.constant 0 : index
    %30 = vector.load %arg4[%c2_20, %c0_21] : memref<4x128xf32, #tpu.memory_space<vmem>>, vector<1x128xf32>
    %c3_22 = arith.constant 3 : index
    %c0_23 = arith.constant 0 : index
    %31 = vector.load %arg4[%c3_22, %c0_23] : memref<4x128xf32, #tpu.memory_space<vmem>>, vector<1x128xf32>
    %c0_24 = arith.constant 0 : index
    %c0_25 = arith.constant 0 : index
    %32 = vector.load %arg6[%c0_24, %c0_25] : memref<1x128xf32, #tpu.memory_space<vmem>>, vector<1x128xf32>
    %cst_26 = arith.constant 1.600000e+01 : f32
    %33 = vector.broadcast %cst_26 : f32 to vector<1x128xf32>
    %34 = arith.mulf %20, %33 : vector<1x128xf32>
    %cst_27 = arith.constant 5.000000e-01 : f32
    %35 = vector.broadcast %cst_27 : f32 to vector<1x128xf32>
    %36 = arith.subf %34, %35 : vector<1x128xf32>
    %37 = arith.fptosi %36 : vector<1x128xf32> to vector<1x128xi32>
    %cst_28 = arith.constant 1.600000e+01 : f32
    %38 = vector.broadcast %cst_28 : f32 to vector<1x128xf32>
    %39 = arith.mulf %21, %38 : vector<1x128xf32>
    %cst_29 = arith.constant 5.000000e-01 : f32
    %40 = vector.broadcast %cst_29 : f32 to vector<1x128xf32>
    %41 = arith.subf %39, %40 : vector<1x128xf32>
    %42 = arith.fptosi %41 : vector<1x128xf32> to vector<1x128xi32>
    %cst_30 = arith.constant 1.600000e+01 : f32
    %43 = vector.broadcast %cst_30 : f32 to vector<1x128xf32>
    %44 = arith.mulf %20, %43 : vector<1x128xf32>
    %45 = arith.sitofp %37 : vector<1x128xi32> to vector<1x128xf32>
    %46 = arith.subf %44, %45 : vector<1x128xf32>
    %cst_31 = arith.constant 1.600000e+01 : f32
    %47 = vector.broadcast %cst_31 : f32 to vector<1x128xf32>
    %48 = arith.mulf %21, %47 : vector<1x128xf32>
    %49 = arith.sitofp %42 : vector<1x128xi32> to vector<1x128xf32>
    %50 = arith.subf %48, %49 : vector<1x128xf32>
    %cst_32 = arith.constant 1.500000e+00 : f32
    %51 = vector.broadcast %cst_32 : f32 to vector<1x128xf32>
    %52 = arith.subf %51, %46 : vector<1x128xf32>
    %53 = arith.mulf %52, %52 : vector<1x128xf32>
    %cst_33 = arith.constant 5.000000e-01 : f32
    %54 = vector.broadcast %cst_33 : f32 to vector<1x128xf32>
    %55 = arith.mulf %54, %53 : vector<1x128xf32>
    %cst_34 = arith.constant 1.000000e+00 : f32
    %56 = vector.broadcast %cst_34 : f32 to vector<1x128xf32>
    %57 = arith.subf %46, %56 : vector<1x128xf32>
    %58 = arith.mulf %57, %57 : vector<1x128xf32>
    %cst_35 = arith.constant 7.500000e-01 : f32
    %59 = vector.broadcast %cst_35 : f32 to vector<1x128xf32>
    %60 = arith.subf %59, %58 : vector<1x128xf32>
    %cst_36 = arith.constant 5.000000e-01 : f32
    %61 = vector.broadcast %cst_36 : f32 to vector<1x128xf32>
    %62 = arith.subf %46, %61 : vector<1x128xf32>
    %63 = arith.mulf %62, %62 : vector<1x128xf32>
    %cst_37 = arith.constant 5.000000e-01 : f32
    %64 = vector.broadcast %cst_37 : f32 to vector<1x128xf32>
    %65 = arith.mulf %64, %63 : vector<1x128xf32>
    %cst_38 = arith.constant 1.500000e+00 : f32
    %66 = vector.broadcast %cst_38 : f32 to vector<1x128xf32>
    %67 = arith.subf %66, %50 : vector<1x128xf32>
    %68 = arith.mulf %67, %67 : vector<1x128xf32>
    %cst_39 = arith.constant 5.000000e-01 : f32
    %69 = vector.broadcast %cst_39 : f32 to vector<1x128xf32>
    %70 = arith.mulf %69, %68 : vector<1x128xf32>
    %cst_40 = arith.constant 1.000000e+00 : f32
    %71 = vector.broadcast %cst_40 : f32 to vector<1x128xf32>
    %72 = arith.subf %50, %71 : vector<1x128xf32>
    %73 = arith.mulf %72, %72 : vector<1x128xf32>
    %cst_41 = arith.constant 7.500000e-01 : f32
    %74 = vector.broadcast %cst_41 : f32 to vector<1x128xf32>
    %75 = arith.subf %74, %73 : vector<1x128xf32>
    %cst_42 = arith.constant 5.000000e-01 : f32
    %76 = vector.broadcast %cst_42 : f32 to vector<1x128xf32>
    %77 = arith.subf %50, %76 : vector<1x128xf32>
    %78 = arith.mulf %77, %77 : vector<1x128xf32>
    %cst_43 = arith.constant 5.000000e-01 : f32
    %79 = vector.broadcast %cst_43 : f32 to vector<1x128xf32>
    %80 = arith.mulf %79, %78 : vector<1x128xf32>
    %cst_44 = arith.constant 0.000000e+00 : f32
    %81 = vector.broadcast %cst_44 : f32 to vector<16x128xf32>
    %cst_45 = arith.constant 0.000000e+00 : f32
    %82 = vector.broadcast %cst_45 : f32 to vector<16x128xf32>
    %c0_i32_46 = arith.constant 0 : i32
    %83 = vector.broadcast %c0_i32_46 : i32 to vector<1x128xi32>
    %84 = arith.addi %37, %83 : vector<1x128xi32>
    %85 = vector.broadcast %84 : vector<1x128xi32> to vector<16x128xi32>
    %86 = vector.broadcast %15 : vector<16x1xi32> to vector<16x128xi32>
    %87 = arith.cmpi eq, %85, %86 : vector<16x128xi32>
    %cst_47 = arith.constant 0.000000e+00 : f32
    %88 = vector.shape_cast %55 : vector<1x128xf32> to vector<1x128xf32>
    %89 = vector.broadcast %88 : vector<1x128xf32> to vector<16x128xf32>
    %90 = vector.broadcast %cst_47 : f32 to vector<16x128xf32>
    %91 = arith.select %87, %89, %90 : vector<16x128xi1>, vector<16x128xf32>
    %92 = arith.addf %81, %91 : vector<16x128xf32>
    %c0_i32_48 = arith.constant 0 : i32
    %93 = vector.broadcast %c0_i32_48 : i32 to vector<1x128xi32>
    %94 = arith.addi %42, %93 : vector<1x128xi32>
    %95 = vector.broadcast %94 : vector<1x128xi32> to vector<16x128xi32>
    %96 = vector.broadcast %15 : vector<16x1xi32> to vector<16x128xi32>
    %97 = arith.cmpi eq, %95, %96 : vector<16x128xi32>
    %cst_49 = arith.constant 0.000000e+00 : f32
    %98 = vector.shape_cast %70 : vector<1x128xf32> to vector<1x128xf32>
    %99 = vector.broadcast %98 : vector<1x128xf32> to vector<16x128xf32>
    %100 = vector.broadcast %cst_49 : f32 to vector<16x128xf32>
    %101 = arith.select %97, %99, %100 : vector<16x128xi1>, vector<16x128xf32>
    %102 = arith.addf %82, %101 : vector<16x128xf32>
    %c1_i32_50 = arith.constant 1 : i32
    %103 = vector.broadcast %c1_i32_50 : i32 to vector<1x128xi32>
    %104 = arith.addi %37, %103 : vector<1x128xi32>
    %105 = vector.broadcast %104 : vector<1x128xi32> to vector<16x128xi32>
    %106 = vector.broadcast %15 : vector<16x1xi32> to vector<16x128xi32>
    %107 = arith.cmpi eq, %105, %106 : vector<16x128xi32>
    %cst_51 = arith.constant 0.000000e+00 : f32
    %108 = vector.shape_cast %60 : vector<1x128xf32> to vector<1x128xf32>
    %109 = vector.broadcast %108 : vector<1x128xf32> to vector<16x128xf32>
    %110 = vector.broadcast %cst_51 : f32 to vector<16x128xf32>
    %111 = arith.select %107, %109, %110 : vector<16x128xi1>, vector<16x128xf32>
    %112 = arith.addf %92, %111 : vector<16x128xf32>
    %c1_i32_52 = arith.constant 1 : i32
    %113 = vector.broadcast %c1_i32_52 : i32 to vector<1x128xi32>
    %114 = arith.addi %42, %113 : vector<1x128xi32>
    %115 = vector.broadcast %114 : vector<1x128xi32> to vector<16x128xi32>
    %116 = vector.broadcast %15 : vector<16x1xi32> to vector<16x128xi32>
    %117 = arith.cmpi eq, %115, %116 : vector<16x128xi32>
    %cst_53 = arith.constant 0.000000e+00 : f32
    %118 = vector.shape_cast %75 : vector<1x128xf32> to vector<1x128xf32>
    %119 = vector.broadcast %118 : vector<1x128xf32> to vector<16x128xf32>
    %120 = vector.broadcast %cst_53 : f32 to vector<16x128xf32>
    %121 = arith.select %117, %119, %120 : vector<16x128xi1>, vector<16x128xf32>
    %122 = arith.addf %102, %121 : vector<16x128xf32>
    %c2_i32_54 = arith.constant 2 : i32
    %123 = vector.broadcast %c2_i32_54 : i32 to vector<1x128xi32>
    %124 = arith.addi %37, %123 : vector<1x128xi32>
    %125 = vector.broadcast %124 : vector<1x128xi32> to vector<16x128xi32>
    %126 = vector.broadcast %15 : vector<16x1xi32> to vector<16x128xi32>
    %127 = arith.cmpi eq, %125, %126 : vector<16x128xi32>
    %cst_55 = arith.constant 0.000000e+00 : f32
    %128 = vector.shape_cast %65 : vector<1x128xf32> to vector<1x128xf32>
    %129 = vector.broadcast %128 : vector<1x128xf32> to vector<16x128xf32>
    %130 = vector.broadcast %cst_55 : f32 to vector<16x128xf32>
    %131 = arith.select %127, %129, %130 : vector<16x128xi1>, vector<16x128xf32>
    %132 = arith.addf %112, %131 : vector<16x128xf32>
    %c2_i32_56 = arith.constant 2 : i32
    %133 = vector.broadcast %c2_i32_56 : i32 to vector<1x128xi32>
    %134 = arith.addi %42, %133 : vector<1x128xi32>
    %135 = vector.broadcast %134 : vector<1x128xi32> to vector<16x128xi32>
    %136 = vector.broadcast %15 : vector<16x1xi32> to vector<16x128xi32>
    %137 = arith.cmpi eq, %135, %136 : vector<16x128xi32>
    %cst_57 = arith.constant 0.000000e+00 : f32
    %138 = vector.shape_cast %80 : vector<1x128xf32> to vector<1x128xf32>
    %139 = vector.broadcast %138 : vector<1x128xf32> to vector<16x128xf32>
    %140 = vector.broadcast %cst_57 : f32 to vector<16x128xf32>
    %141 = arith.select %137, %139, %140 : vector<16x128xi1>, vector<16x128xf32>
    %142 = arith.addf %122, %141 : vector<16x128xf32>
    %143 = arith.mulf %24, %28 : vector<1x128xf32>
    %144 = arith.mulf %25, %30 : vector<1x128xf32>
    %145 = arith.addf %143, %144 : vector<1x128xf32>
    %cst_58 = arith.constant 9.99999974E-5 : f32
    %146 = vector.broadcast %cst_58 : f32 to vector<1x128xf32>
    %147 = arith.mulf %146, %145 : vector<1x128xf32>
    %148 = arith.addf %28, %147 : vector<1x128xf32>
    %149 = arith.mulf %24, %29 : vector<1x128xf32>
    %150 = arith.mulf %25, %31 : vector<1x128xf32>
    %151 = arith.addf %149, %150 : vector<1x128xf32>
    %cst_59 = arith.constant 9.99999974E-5 : f32
    %152 = vector.broadcast %cst_59 : f32 to vector<1x128xf32>
    %153 = arith.mulf %152, %151 : vector<1x128xf32>
    %154 = arith.addf %29, %153 : vector<1x128xf32>
    %155 = arith.mulf %26, %28 : vector<1x128xf32>
    %156 = arith.mulf %27, %30 : vector<1x128xf32>
    %157 = arith.addf %155, %156 : vector<1x128xf32>
    %cst_60 = arith.constant 9.99999974E-5 : f32
    %158 = vector.broadcast %cst_60 : f32 to vector<1x128xf32>
    %159 = arith.mulf %158, %157 : vector<1x128xf32>
    %160 = arith.addf %30, %159 : vector<1x128xf32>
    %161 = arith.mulf %26, %29 : vector<1x128xf32>
    %162 = arith.mulf %27, %31 : vector<1x128xf32>
    %163 = arith.addf %161, %162 : vector<1x128xf32>
    %cst_61 = arith.constant 9.99999974E-5 : f32
    %164 = vector.broadcast %cst_61 : f32 to vector<1x128xf32>
    %165 = arith.mulf %164, %163 : vector<1x128xf32>
    %166 = arith.addf %31, %165 : vector<1x128xf32>
    %cst_62 = arith.constant 1.000000e+00 : f32
    %167 = vector.broadcast %cst_62 : f32 to vector<1x128xf32>
    %168 = arith.subf %167, %32 : vector<1x128xf32>
    %cst_63 = arith.constant 1.000000e+01 : f32
    %169 = vector.broadcast %cst_63 : f32 to vector<1x128xf32>
    %170 = arith.mulf %169, %168 : vector<1x128xf32>
    %171 = math.exp %170 : vector<1x128xf32>
    %cst_64 = arith.constant 3.000000e-01 : f32
    %172 = vector.broadcast %cst_64 : f32 to vector<1x128xf32>
    %173 = arith.select %4, %172, %171 : vector<1x128xi1>, vector<1x128xf32>
    %cst_65 = arith.constant 416.666656 : f32
    %174 = vector.broadcast %cst_65 : f32 to vector<1x128xf32>
    %175 = arith.mulf %174, %173 : vector<1x128xf32>
    %cst_66 = arith.constant 0.000000e+00 : f32
    %176 = vector.broadcast %cst_66 : f32 to vector<1x128xf32>
    %177 = arith.select %2, %176, %175 : vector<1x128xi1>, vector<1x128xf32>
    %cst_67 = arith.constant 277.777771 : f32
    %178 = vector.broadcast %cst_67 : f32 to vector<1x128xf32>
    %179 = arith.mulf %178, %173 : vector<1x128xf32>
    %180 = arith.mulf %148, %148 : vector<1x128xf32>
    %181 = arith.mulf %160, %160 : vector<1x128xf32>
    %182 = arith.addf %180, %181 : vector<1x128xf32>
    %183 = arith.mulf %148, %154 : vector<1x128xf32>
    %184 = arith.mulf %160, %166 : vector<1x128xf32>
    %185 = arith.addf %183, %184 : vector<1x128xf32>
    %186 = arith.mulf %154, %154 : vector<1x128xf32>
    %187 = arith.mulf %166, %166 : vector<1x128xf32>
    %188 = arith.addf %186, %187 : vector<1x128xf32>
    %189 = arith.addf %182, %188 : vector<1x128xf32>
    %190 = arith.subf %182, %188 : vector<1x128xf32>
    %191 = arith.mulf %190, %190 : vector<1x128xf32>
    %cst_68 = arith.constant 4.000000e+00 : f32
    %192 = vector.broadcast %cst_68 : f32 to vector<1x128xf32>
    %193 = arith.mulf %192, %185 : vector<1x128xf32>
    %194 = arith.mulf %193, %185 : vector<1x128xf32>
    %195 = arith.addf %191, %194 : vector<1x128xf32>
    %196 = math.sqrt %195 : vector<1x128xf32>
    %197 = arith.addf %189, %196 : vector<1x128xf32>
    %cst_69 = arith.constant 5.000000e-01 : f32
    %198 = vector.broadcast %cst_69 : f32 to vector<1x128xf32>
    %199 = arith.mulf %198, %197 : vector<1x128xf32>
    %cst_70 = arith.constant 0.000000e+00 : f32
    %200 = vector.broadcast %cst_70 : f32 to vector<1x128xf32>
    %201 = arith.maximumf %199, %200 : vector<1x128xf32>
    %202 = math.sqrt %201 : vector<1x128xf32>
    %203 = arith.subf %189, %196 : vector<1x128xf32>
    %cst_71 = arith.constant 5.000000e-01 : f32
    %204 = vector.broadcast %cst_71 : f32 to vector<1x128xf32>
    %205 = arith.mulf %204, %203 : vector<1x128xf32>
    %cst_72 = arith.constant 0.000000e+00 : f32
    %206 = vector.broadcast %cst_72 : f32 to vector<1x128xf32>
    %207 = arith.maximumf %205, %206 : vector<1x128xf32>
    %208 = math.sqrt %207 : vector<1x128xf32>
    %cst_73 = arith.constant 9.99999996E-13 : f32
    %209 = vector.broadcast %cst_73 : f32 to vector<1x128xf32>
    %210 = arith.maximumf %196, %209 : vector<1x128xf32>
    %cst_74 = arith.constant 9.99999996E-13 : f32
    %211 = vector.broadcast %cst_74 : f32 to vector<1x128xf32>
    %212 = arith.cmpf ogt, %196, %211 : vector<1x128xf32>
    %213 = arith.divf %190, %210 : vector<1x128xf32>
    %cst_75 = arith.constant 1.000000e+00 : f32
    %214 = vector.broadcast %cst_75 : f32 to vector<1x128xf32>
    %215 = arith.select %212, %213, %214 : vector<1x128xi1>, vector<1x128xf32>
    %cst_76 = arith.constant 9.99999996E-13 : f32
    %216 = vector.broadcast %cst_76 : f32 to vector<1x128xf32>
    %217 = arith.cmpf ogt, %196, %216 : vector<1x128xf32>
    %cst_77 = arith.constant 2.000000e+00 : f32
    %218 = vector.broadcast %cst_77 : f32 to vector<1x128xf32>
    %219 = arith.mulf %218, %185 : vector<1x128xf32>
    %220 = arith.divf %219, %210 : vector<1x128xf32>
    %cst_78 = arith.constant 0.000000e+00 : f32
    %221 = vector.broadcast %cst_78 : f32 to vector<1x128xf32>
    %222 = arith.select %217, %220, %221 : vector<1x128xi1>, vector<1x128xf32>
    %cst_79 = arith.constant 1.000000e+00 : f32
    %223 = vector.broadcast %cst_79 : f32 to vector<1x128xf32>
    %224 = arith.addf %223, %215 : vector<1x128xf32>
    %cst_80 = arith.constant 5.000000e-01 : f32
    %225 = vector.broadcast %cst_80 : f32 to vector<1x128xf32>
    %226 = arith.mulf %225, %224 : vector<1x128xf32>
    %cst_81 = arith.constant 0.000000e+00 : f32
    %227 = vector.broadcast %cst_81 : f32 to vector<1x128xf32>
    %228 = arith.maximumf %226, %227 : vector<1x128xf32>
    %229 = math.sqrt %228 : vector<1x128xf32>
    %cst_82 = arith.constant 9.99999997E-7 : f32
    %230 = vector.broadcast %cst_82 : f32 to vector<1x128xf32>
    %231 = arith.cmpf ogt, %229, %230 : vector<1x128xf32>
    %cst_83 = arith.constant 9.99999997E-7 : f32
    %232 = vector.broadcast %cst_83 : f32 to vector<1x128xf32>
    %233 = arith.maximumf %229, %232 : vector<1x128xf32>
    %cst_84 = arith.constant 2.000000e+00 : f32
    %234 = vector.broadcast %cst_84 : f32 to vector<1x128xf32>
    %235 = arith.mulf %234, %233 : vector<1x128xf32>
    %236 = arith.divf %222, %235 : vector<1x128xf32>
    %cst_85 = arith.constant 1.000000e+00 : f32
    %237 = vector.broadcast %cst_85 : f32 to vector<1x128xf32>
    %238 = arith.select %231, %236, %237 : vector<1x128xi1>, vector<1x128xf32>
    %cst_86 = arith.constant 9.99999996E-13 : f32
    %239 = vector.broadcast %cst_86 : f32 to vector<1x128xf32>
    %240 = arith.maximumf %202, %239 : vector<1x128xf32>
    %cst_87 = arith.constant 1.000000e+00 : f32
    %241 = vector.broadcast %cst_87 : f32 to vector<1x128xf32>
    %242 = arith.divf %241, %240 : vector<1x128xf32>
    %cst_88 = arith.constant 9.99999996E-13 : f32
    %243 = vector.broadcast %cst_88 : f32 to vector<1x128xf32>
    %244 = arith.maximumf %208, %243 : vector<1x128xf32>
    %cst_89 = arith.constant 1.000000e+00 : f32
    %245 = vector.broadcast %cst_89 : f32 to vector<1x128xf32>
    %246 = arith.divf %245, %244 : vector<1x128xf32>
    %247 = arith.mulf %148, %229 : vector<1x128xf32>
    %248 = arith.mulf %154, %238 : vector<1x128xf32>
    %249 = arith.addf %247, %248 : vector<1x128xf32>
    %250 = arith.mulf %249, %242 : vector<1x128xf32>
    %251 = arith.mulf %160, %229 : vector<1x128xf32>
    %252 = arith.mulf %166, %238 : vector<1x128xf32>
    %253 = arith.addf %251, %252 : vector<1x128xf32>
    %254 = arith.mulf %253, %242 : vector<1x128xf32>
    %255 = arith.mulf %154, %229 : vector<1x128xf32>
    %256 = arith.mulf %148, %238 : vector<1x128xf32>
    %257 = arith.subf %255, %256 : vector<1x128xf32>
    %258 = arith.mulf %257, %246 : vector<1x128xf32>
    %259 = arith.mulf %166, %229 : vector<1x128xf32>
    %260 = arith.mulf %160, %238 : vector<1x128xf32>
    %261 = arith.subf %259, %260 : vector<1x128xf32>
    %262 = arith.mulf %261, %246 : vector<1x128xf32>
    %cst_90 = arith.constant 9.750000e-01 : f32
    %cst_91 = arith.constant 1.004500e+00 : f32
    %263 = vector.broadcast %cst_90 : f32 to vector<1x128xf32>
    %264 = arith.maximumf %263, %202 : vector<1x128xf32>
    %265 = vector.broadcast %cst_91 : f32 to vector<1x128xf32>
    %266 = arith.minimumf %265, %264 : vector<1x128xf32>
    %cst_92 = arith.constant 9.750000e-01 : f32
    %cst_93 = arith.constant 1.004500e+00 : f32
    %267 = vector.broadcast %cst_92 : f32 to vector<1x128xf32>
    %268 = arith.maximumf %267, %208 : vector<1x128xf32>
    %269 = vector.broadcast %cst_93 : f32 to vector<1x128xf32>
    %270 = arith.minimumf %269, %268 : vector<1x128xf32>
    %271 = arith.divf %202, %266 : vector<1x128xf32>
    %272 = arith.mulf %32, %271 : vector<1x128xf32>
    %273 = arith.divf %208, %270 : vector<1x128xf32>
    %274 = arith.mulf %272, %273 : vector<1x128xf32>
    %275 = arith.select %6, %274, %32 : vector<1x128xi1>, vector<1x128xf32>
    %276 = arith.select %6, %266, %202 : vector<1x128xi1>, vector<1x128xf32>
    %277 = arith.select %6, %270, %208 : vector<1x128xi1>, vector<1x128xf32>
    %278 = arith.mulf %276, %277 : vector<1x128xf32>
    %279 = math.sqrt %278 : vector<1x128xf32>
    %280 = arith.mulf %250, %276 : vector<1x128xf32>
    %281 = arith.mulf %280, %229 : vector<1x128xf32>
    %282 = arith.mulf %258, %277 : vector<1x128xf32>
    %283 = arith.mulf %282, %238 : vector<1x128xf32>
    %284 = arith.subf %281, %283 : vector<1x128xf32>
    %285 = arith.mulf %250, %276 : vector<1x128xf32>
    %286 = arith.mulf %285, %238 : vector<1x128xf32>
    %287 = arith.mulf %258, %277 : vector<1x128xf32>
    %288 = arith.mulf %287, %229 : vector<1x128xf32>
    %289 = arith.addf %286, %288 : vector<1x128xf32>
    %290 = arith.mulf %254, %276 : vector<1x128xf32>
    %291 = arith.mulf %290, %229 : vector<1x128xf32>
    %292 = arith.mulf %262, %277 : vector<1x128xf32>
    %293 = arith.mulf %292, %238 : vector<1x128xf32>
    %294 = arith.subf %291, %293 : vector<1x128xf32>
    %295 = arith.mulf %254, %276 : vector<1x128xf32>
    %296 = arith.mulf %295, %238 : vector<1x128xf32>
    %297 = arith.mulf %262, %277 : vector<1x128xf32>
    %298 = arith.mulf %297, %229 : vector<1x128xf32>
    %299 = arith.addf %296, %298 : vector<1x128xf32>
    %300 = arith.select %6, %284, %148 : vector<1x128xi1>, vector<1x128xf32>
    %301 = arith.select %2, %279, %300 : vector<1x128xi1>, vector<1x128xf32>
    %302 = arith.select %6, %289, %154 : vector<1x128xi1>, vector<1x128xf32>
    %cst_94 = arith.constant 0.000000e+00 : f32
    %303 = vector.broadcast %cst_94 : f32 to vector<1x128xf32>
    %304 = arith.select %2, %303, %302 : vector<1x128xi1>, vector<1x128xf32>
    %305 = arith.select %6, %294, %160 : vector<1x128xi1>, vector<1x128xf32>
    %cst_95 = arith.constant 0.000000e+00 : f32
    %306 = vector.broadcast %cst_95 : f32 to vector<1x128xf32>
    %307 = arith.select %2, %306, %305 : vector<1x128xi1>, vector<1x128xf32>
    %308 = arith.select %6, %299, %166 : vector<1x128xi1>, vector<1x128xf32>
    %309 = arith.select %2, %279, %308 : vector<1x128xi1>, vector<1x128xf32>
    %310 = arith.mulf %250, %229 : vector<1x128xf32>
    %311 = arith.mulf %258, %238 : vector<1x128xf32>
    %312 = arith.subf %310, %311 : vector<1x128xf32>
    %313 = arith.subf %301, %312 : vector<1x128xf32>
    %314 = arith.mulf %250, %238 : vector<1x128xf32>
    %315 = arith.mulf %258, %229 : vector<1x128xf32>
    %316 = arith.addf %314, %315 : vector<1x128xf32>
    %317 = arith.subf %304, %316 : vector<1x128xf32>
    %318 = arith.mulf %254, %229 : vector<1x128xf32>
    %319 = arith.mulf %262, %238 : vector<1x128xf32>
    %320 = arith.subf %318, %319 : vector<1x128xf32>
    %321 = arith.subf %307, %320 : vector<1x128xf32>
    %322 = arith.mulf %254, %238 : vector<1x128xf32>
    %323 = arith.mulf %262, %229 : vector<1x128xf32>
    %324 = arith.addf %322, %323 : vector<1x128xf32>
    %325 = arith.subf %309, %324 : vector<1x128xf32>
    %326 = arith.mulf %179, %278 : vector<1x128xf32>
    %cst_96 = arith.constant 1.000000e+00 : f32
    %327 = vector.broadcast %cst_96 : f32 to vector<1x128xf32>
    %328 = arith.subf %278, %327 : vector<1x128xf32>
    %329 = arith.mulf %326, %328 : vector<1x128xf32>
    %cst_97 = arith.constant 2.000000e+00 : f32
    %330 = vector.broadcast %cst_97 : f32 to vector<1x128xf32>
    %331 = arith.mulf %330, %177 : vector<1x128xf32>
    %332 = arith.mulf %313, %301 : vector<1x128xf32>
    %333 = arith.mulf %317, %304 : vector<1x128xf32>
    %334 = arith.addf %332, %333 : vector<1x128xf32>
    %335 = arith.mulf %331, %334 : vector<1x128xf32>
    %336 = arith.addf %335, %329 : vector<1x128xf32>
    %cst_98 = arith.constant -9.99999974E-5 : f32
    %337 = vector.broadcast %cst_98 : f32 to vector<1x128xf32>
    %338 = arith.mulf %337, %336 : vector<1x128xf32>
    %cst_99 = arith.constant 9.765625E-4 : f32
    %339 = vector.broadcast %cst_99 : f32 to vector<1x128xf32>
    %340 = arith.mulf %339, %24 : vector<1x128xf32>
    %341 = arith.addf %338, %340 : vector<1x128xf32>
    %cst_100 = arith.constant 2.000000e+00 : f32
    %342 = vector.broadcast %cst_100 : f32 to vector<1x128xf32>
    %343 = arith.mulf %342, %177 : vector<1x128xf32>
    %344 = arith.mulf %313, %307 : vector<1x128xf32>
    %345 = arith.mulf %317, %309 : vector<1x128xf32>
    %346 = arith.addf %344, %345 : vector<1x128xf32>
    %347 = arith.mulf %343, %346 : vector<1x128xf32>
    %cst_101 = arith.constant -9.99999974E-5 : f32
    %348 = vector.broadcast %cst_101 : f32 to vector<1x128xf32>
    %349 = arith.mulf %348, %347 : vector<1x128xf32>
    %cst_102 = arith.constant 9.765625E-4 : f32
    %350 = vector.broadcast %cst_102 : f32 to vector<1x128xf32>
    %351 = arith.mulf %350, %25 : vector<1x128xf32>
    %352 = arith.addf %349, %351 : vector<1x128xf32>
    %cst_103 = arith.constant 2.000000e+00 : f32
    %353 = vector.broadcast %cst_103 : f32 to vector<1x128xf32>
    %354 = arith.mulf %353, %177 : vector<1x128xf32>
    %355 = arith.mulf %321, %301 : vector<1x128xf32>
    %356 = arith.mulf %325, %304 : vector<1x128xf32>
    %357 = arith.addf %355, %356 : vector<1x128xf32>
    %358 = arith.mulf %354, %357 : vector<1x128xf32>
    %cst_104 = arith.constant -9.99999974E-5 : f32
    %359 = vector.broadcast %cst_104 : f32 to vector<1x128xf32>
    %360 = arith.mulf %359, %358 : vector<1x128xf32>
    %cst_105 = arith.constant 9.765625E-4 : f32
    %361 = vector.broadcast %cst_105 : f32 to vector<1x128xf32>
    %362 = arith.mulf %361, %26 : vector<1x128xf32>
    %363 = arith.addf %360, %362 : vector<1x128xf32>
    %cst_106 = arith.constant 2.000000e+00 : f32
    %364 = vector.broadcast %cst_106 : f32 to vector<1x128xf32>
    %365 = arith.mulf %364, %177 : vector<1x128xf32>
    %366 = arith.mulf %321, %307 : vector<1x128xf32>
    %367 = arith.mulf %325, %309 : vector<1x128xf32>
    %368 = arith.addf %366, %367 : vector<1x128xf32>
    %369 = arith.mulf %365, %368 : vector<1x128xf32>
    %370 = arith.addf %369, %329 : vector<1x128xf32>
    %cst_107 = arith.constant -9.99999974E-5 : f32
    %371 = vector.broadcast %cst_107 : f32 to vector<1x128xf32>
    %372 = arith.mulf %371, %370 : vector<1x128xf32>
    %cst_108 = arith.constant 9.765625E-4 : f32
    %373 = vector.broadcast %cst_108 : f32 to vector<1x128xf32>
    %374 = arith.mulf %373, %27 : vector<1x128xf32>
    %375 = arith.addf %372, %374 : vector<1x128xf32>
    %cst_109 = arith.constant 9.765625E-4 : f32
    %376 = vector.broadcast %cst_109 : f32 to vector<1x128xf32>
    %377 = arith.mulf %376, %22 : vector<1x128xf32>
    %378 = arith.mulf %341, %20 : vector<1x128xf32>
    %379 = arith.mulf %352, %21 : vector<1x128xf32>
    %380 = arith.addf %378, %379 : vector<1x128xf32>
    %381 = arith.subf %377, %380 : vector<1x128xf32>
    %cst_110 = arith.constant 9.765625E-4 : f32
    %382 = vector.broadcast %cst_110 : f32 to vector<1x128xf32>
    %383 = arith.mulf %382, %23 : vector<1x128xf32>
    %384 = arith.mulf %363, %20 : vector<1x128xf32>
    %385 = arith.mulf %375, %21 : vector<1x128xf32>
    %386 = arith.addf %384, %385 : vector<1x128xf32>
    %387 = arith.subf %383, %386 : vector<1x128xf32>
    %388 = vector.broadcast %381 : vector<1x128xf32> to vector<16x128xf32>
    %389 = arith.mulf %132, %388 : vector<16x128xf32>
    %390 = vector.broadcast %387 : vector<1x128xf32> to vector<16x128xf32>
    %391 = arith.mulf %132, %390 : vector<16x128xf32>
    %392 = vector.broadcast %341 : vector<1x128xf32> to vector<16x128xf32>
    %393 = arith.mulf %132, %392 : vector<16x128xf32>
    %394 = vector.broadcast %352 : vector<1x128xf32> to vector<16x128xf32>
    %395 = arith.mulf %132, %394 : vector<16x128xf32>
    %396 = vector.broadcast %363 : vector<1x128xf32> to vector<16x128xf32>
    %397 = arith.mulf %132, %396 : vector<16x128xf32>
    %398 = vector.broadcast %375 : vector<1x128xf32> to vector<16x128xf32>
    %399 = arith.mulf %132, %398 : vector<16x128xf32>
    %400 = tpu.concatenate %389, %391, %393, %395, %397, %399, %132 in 0 : vector<16x128xf32>, vector<16x128xf32>, vector<16x128xf32>, vector<16x128xf32>, vector<16x128xf32>, vector<16x128xf32>, vector<16x128xf32> -> vector<112x128xf32>
    %cst_111 = arith.constant dense<0.000000e+00> : vector<112x16xf32>
    %401 = tpu.matmul %400, %142, %cst_111 {dimension_numbers = #tpu.dot_dimension_numbers<[1], [1], [0], [0], [0, 0, 1, 0], [], []>} : vector<112x128xf32>, vector<16x128xf32>, vector<112x16xf32> -> vector<112x16xf32>
    %402 = vector.extract_strided_slice %401 {offsets = [0, 0], sizes = [16, 16], strides = [1, 1]} : vector<112x16xf32> to vector<16x16xf32>
    %403 = vector.extract_strided_slice %401 {offsets = [16, 0], sizes = [16, 16], strides = [1, 1]} : vector<112x16xf32> to vector<16x16xf32>
    %404 = vector.extract_strided_slice %401 {offsets = [32, 0], sizes = [16, 16], strides = [1, 1]} : vector<112x16xf32> to vector<16x16xf32>
    %405 = vector.extract_strided_slice %401 {offsets = [48, 0], sizes = [16, 16], strides = [1, 1]} : vector<112x16xf32> to vector<16x16xf32>
    %406 = vector.extract_strided_slice %401 {offsets = [64, 0], sizes = [16, 16], strides = [1, 1]} : vector<112x16xf32> to vector<16x16xf32>
    %407 = vector.extract_strided_slice %401 {offsets = [80, 0], sizes = [16, 16], strides = [1, 1]} : vector<112x16xf32> to vector<16x16xf32>
    %408 = vector.extract_strided_slice %401 {offsets = [96, 0], sizes = [16, 16], strides = [1, 1]} : vector<112x16xf32> to vector<16x16xf32>
    %cst_112 = arith.constant 9.765625E-4 : f32
    %409 = vector.broadcast %cst_112 : f32 to vector<16x16xf32>
    %410 = arith.mulf %409, %408 : vector<16x16xf32>
    %411 = arith.mulf %404, %11 : vector<16x16xf32>
    %412 = arith.addf %402, %411 : vector<16x16xf32>
    %413 = arith.mulf %405, %14 : vector<16x16xf32>
    %414 = arith.addf %412, %413 : vector<16x16xf32>
    %415 = arith.mulf %406, %11 : vector<16x16xf32>
    %416 = arith.addf %403, %415 : vector<16x16xf32>
    %417 = arith.mulf %407, %14 : vector<16x16xf32>
    %418 = arith.addf %416, %417 : vector<16x16xf32>
    %cst_113 = arith.constant 0.000000e+00 : f32
    %419 = vector.broadcast %cst_113 : f32 to vector<16x16xf32>
    %420 = arith.cmpf ogt, %410, %419 : vector<16x16xf32>
    %cst_114 = arith.constant 1.000000e+00 : f32
    %421 = vector.broadcast %cst_114 : f32 to vector<16x16xf32>
    %422 = arith.select %420, %410, %421 : vector<16x16xi1>, vector<16x16xf32>
    %cst_115 = arith.constant 1.000000e+00 : f32
    %423 = vector.broadcast %cst_115 : f32 to vector<16x16xf32>
    %424 = arith.divf %423, %422 : vector<16x16xf32>
    %425 = arith.mulf %414, %424 : vector<16x16xf32>
    %426 = arith.select %420, %425, %414 : vector<16x16xi1>, vector<16x16xf32>
    %427 = arith.mulf %418, %424 : vector<16x16xf32>
    %428 = arith.select %420, %427, %418 : vector<16x16xi1>, vector<16x16xf32>
    %cst_116 = arith.constant 5.000000e-03 : f32
    %429 = vector.broadcast %cst_116 : f32 to vector<16x16xf32>
    %430 = arith.subf %428, %429 : vector<16x16xf32>
    %c3_i32 = arith.constant 3 : i32
    %431 = vector.broadcast %c3_i32 : i32 to vector<16x16xi32>
    %432 = arith.cmpi slt, %7, %431 : vector<16x16xi32>
    %cst_117 = arith.constant 0.000000e+00 : f32
    %433 = vector.broadcast %cst_117 : f32 to vector<16x16xf32>
    %434 = arith.maximumf %426, %433 : vector<16x16xf32>
    %435 = arith.select %432, %434, %426 : vector<16x16xi1>, vector<16x16xf32>
    %c14_i32 = arith.constant 14 : i32
    %436 = vector.broadcast %c14_i32 : i32 to vector<16x16xi32>
    %437 = arith.cmpi sge, %7, %436 : vector<16x16xi32>
    %cst_118 = arith.constant 0.000000e+00 : f32
    %438 = vector.broadcast %cst_118 : f32 to vector<16x16xf32>
    %439 = arith.minimumf %435, %438 : vector<16x16xf32>
    %440 = arith.select %437, %439, %435 : vector<16x16xi1>, vector<16x16xf32>
    %c3_i32_119 = arith.constant 3 : i32
    %441 = vector.broadcast %c3_i32_119 : i32 to vector<16x16xi32>
    %442 = arith.cmpi slt, %8, %441 : vector<16x16xi32>
    %cst_120 = arith.constant 0.000000e+00 : f32
    %443 = vector.broadcast %cst_120 : f32 to vector<16x16xf32>
    %444 = arith.maximumf %430, %443 : vector<16x16xf32>
    %445 = arith.select %442, %444, %430 : vector<16x16xi1>, vector<16x16xf32>
    %c14_i32_121 = arith.constant 14 : i32
    %446 = vector.broadcast %c14_i32_121 : i32 to vector<16x16xi32>
    %447 = arith.cmpi sge, %8, %446 : vector<16x16xi32>
    %cst_122 = arith.constant 0.000000e+00 : f32
    %448 = vector.broadcast %cst_122 : f32 to vector<16x16xf32>
    %449 = arith.minimumf %445, %448 : vector<16x16xf32>
    %450 = arith.select %447, %449, %445 : vector<16x16xi1>, vector<16x16xf32>
    %451 = arith.mulf %440, %14 : vector<16x16xf32>
    %452 = arith.mulf %450, %14 : vector<16x16xf32>
    %453 = tpu.concatenate %440, %450, %451, %452 in 0 : vector<16x16xf32>, vector<16x16xf32>, vector<16x16xf32>, vector<16x16xf32> -> vector<64x16xf32>
    %cst_123 = arith.constant dense<0.000000e+00> : vector<64x128xf32>
    %454 = tpu.matmul %453, %142, %cst_123 {dimension_numbers = #tpu.dot_dimension_numbers<[1], [0], [0], [1], [0, 0, 1, 1], [], []>} : vector<64x16xf32>, vector<16x128xf32>, vector<64x128xf32> -> vector<64x128xf32>
    %455 = vector.extract_strided_slice %454 {offsets = [0, 0], sizes = [16, 128], strides = [1, 1]} : vector<64x128xf32> to vector<16x128xf32>
    %456 = vector.extract_strided_slice %454 {offsets = [16, 0], sizes = [16, 128], strides = [1, 1]} : vector<64x128xf32> to vector<16x128xf32>
    %457 = vector.extract_strided_slice %454 {offsets = [32, 0], sizes = [16, 128], strides = [1, 1]} : vector<64x128xf32> to vector<16x128xf32>
    %458 = vector.extract_strided_slice %454 {offsets = [48, 0], sizes = [16, 128], strides = [1, 1]} : vector<64x128xf32> to vector<16x128xf32>
    %459 = arith.mulf %132, %19 : vector<16x128xf32>
    %460 = arith.mulf %132, %455 : vector<16x128xf32>
    %cst_124 = arith.constant dense<0.000000e+00> : vector<128xf32>
    %461 = vector.multi_reduction <add>, %460, %cst_124 [0] : vector<16x128xf32> to vector<128xf32>
    %462 = vector.shape_cast %461 : vector<128xf32> to vector<1x128xf32>
    %463 = arith.mulf %132, %456 : vector<16x128xf32>
    %cst_125 = arith.constant dense<0.000000e+00> : vector<128xf32>
    %464 = vector.multi_reduction <add>, %463, %cst_125 [0] : vector<16x128xf32> to vector<128xf32>
    %465 = vector.shape_cast %464 : vector<128xf32> to vector<1x128xf32>
    %466 = arith.mulf %459, %455 : vector<16x128xf32>
    %cst_126 = arith.constant dense<0.000000e+00> : vector<128xf32>
    %467 = vector.multi_reduction <add>, %466, %cst_126 [0] : vector<16x128xf32> to vector<128xf32>
    %468 = vector.shape_cast %467 : vector<128xf32> to vector<1x128xf32>
    %469 = arith.mulf %132, %457 : vector<16x128xf32>
    %cst_127 = arith.constant dense<0.000000e+00> : vector<128xf32>
    %470 = vector.multi_reduction <add>, %469, %cst_127 [0] : vector<16x128xf32> to vector<128xf32>
    %471 = vector.shape_cast %470 : vector<128xf32> to vector<1x128xf32>
    %472 = arith.mulf %459, %456 : vector<16x128xf32>
    %cst_128 = arith.constant dense<0.000000e+00> : vector<128xf32>
    %473 = vector.multi_reduction <add>, %472, %cst_128 [0] : vector<16x128xf32> to vector<128xf32>
    %474 = vector.shape_cast %473 : vector<128xf32> to vector<1x128xf32>
    %475 = arith.mulf %132, %458 : vector<16x128xf32>
    %cst_129 = arith.constant dense<0.000000e+00> : vector<128xf32>
    %476 = vector.multi_reduction <add>, %475, %cst_129 [0] : vector<16x128xf32> to vector<128xf32>
    %477 = vector.shape_cast %476 : vector<128xf32> to vector<1x128xf32>
    %478 = arith.mulf %462, %20 : vector<1x128xf32>
    %479 = arith.subf %468, %478 : vector<1x128xf32>
    %cst_130 = arith.constant 1.024000e+03 : f32
    %480 = vector.broadcast %cst_130 : f32 to vector<1x128xf32>
    %481 = arith.mulf %479, %480 : vector<1x128xf32>
    %482 = arith.mulf %462, %21 : vector<1x128xf32>
    %483 = arith.subf %471, %482 : vector<1x128xf32>
    %cst_131 = arith.constant 1.024000e+03 : f32
    %484 = vector.broadcast %cst_131 : f32 to vector<1x128xf32>
    %485 = arith.mulf %483, %484 : vector<1x128xf32>
    %486 = arith.mulf %465, %20 : vector<1x128xf32>
    %487 = arith.subf %474, %486 : vector<1x128xf32>
    %cst_132 = arith.constant 1.024000e+03 : f32
    %488 = vector.broadcast %cst_132 : f32 to vector<1x128xf32>
    %489 = arith.mulf %487, %488 : vector<1x128xf32>
    %490 = arith.mulf %465, %21 : vector<1x128xf32>
    %491 = arith.subf %477, %490 : vector<1x128xf32>
    %cst_133 = arith.constant 1.024000e+03 : f32
    %492 = vector.broadcast %cst_133 : f32 to vector<1x128xf32>
    %493 = arith.mulf %491, %492 : vector<1x128xf32>
    %cst_134 = arith.constant 9.99999974E-5 : f32
    %494 = vector.broadcast %cst_134 : f32 to vector<1x128xf32>
    %495 = arith.mulf %494, %462 : vector<1x128xf32>
    %496 = arith.addf %20, %495 : vector<1x128xf32>
    %cst_135 = arith.constant 9.99999974E-5 : f32
    %497 = vector.broadcast %cst_135 : f32 to vector<1x128xf32>
    %498 = arith.mulf %497, %465 : vector<1x128xf32>
    %499 = arith.addf %21, %498 : vector<1x128xf32>
    %500 = tpu.iota {dimensions = array<i32: 0>} : vector<2x128xi32>
    %501 = vector.shape_cast %496 : vector<1x128xf32> to vector<1x128xf32>
    %502 = vector.broadcast %501 : vector<1x128xf32> to vector<2x128xf32>
    %c1_i32_136 = arith.constant 1 : i32
    %503 = vector.broadcast %c1_i32_136 : i32 to vector<2x128xi32>
    %504 = arith.cmpi eq, %500, %503 : vector<2x128xi32>
    %505 = vector.shape_cast %499 : vector<1x128xf32> to vector<1x128xf32>
    %506 = vector.broadcast %505 : vector<1x128xf32> to vector<2x128xf32>
    %507 = arith.select %504, %506, %502 : vector<2x128xi1>, vector<2x128xf32>
    %c0_137 = arith.constant 0 : index
    %c0_138 = arith.constant 0 : index
    %508 = vector.load %arg7[%c0_137, %c0_138] : memref<2x128xf32, #tpu.memory_space<vmem>>, vector<2x128xf32>
    tpu.vector_store %arg7[%c0_137, %c0_138], %507 {strides = array<i32>} : memref<2x128xf32, #tpu.memory_space<vmem>>, vector<2x128xf32>,
    %509 = tpu.iota {dimensions = array<i32: 0>} : vector<2x128xi32>
    %510 = vector.shape_cast %462 : vector<1x128xf32> to vector<1x128xf32>
    %511 = vector.broadcast %510 : vector<1x128xf32> to vector<2x128xf32>
    %c1_i32_139 = arith.constant 1 : i32
    %512 = vector.broadcast %c1_i32_139 : i32 to vector<2x128xi32>
    %513 = arith.cmpi eq, %509, %512 : vector<2x128xi32>
    %514 = vector.shape_cast %465 : vector<1x128xf32> to vector<1x128xf32>
    %515 = vector.broadcast %514 : vector<1x128xf32> to vector<2x128xf32>
    %516 = arith.select %513, %515, %511 : vector<2x128xi1>, vector<2x128xf32>
    %c0_140 = arith.constant 0 : index
    %c0_141 = arith.constant 0 : index
    %517 = vector.load %arg8[%c0_140, %c0_141] : memref<2x128xf32, #tpu.memory_space<vmem>>, vector<2x128xf32>
    tpu.vector_store %arg8[%c0_140, %c0_141], %516 {strides = array<i32>} : memref<2x128xf32, #tpu.memory_space<vmem>>, vector<2x128xf32>,
    %518 = tpu.iota {dimensions = array<i32: 0>} : vector<4x128xi32>
    %519 = vector.shape_cast %481 : vector<1x128xf32> to vector<1x128xf32>
    %520 = vector.broadcast %519 : vector<1x128xf32> to vector<4x128xf32>
    %c1_i32_142 = arith.constant 1 : i32
    %521 = vector.broadcast %c1_i32_142 : i32 to vector<4x128xi32>
    %522 = arith.cmpi eq, %518, %521 : vector<4x128xi32>
    %523 = vector.shape_cast %485 : vector<1x128xf32> to vector<1x128xf32>
    %524 = vector.broadcast %523 : vector<1x128xf32> to vector<4x128xf32>
    %525 = arith.select %522, %524, %520 : vector<4x128xi1>, vector<4x128xf32>
    %c2_i32_143 = arith.constant 2 : i32
    %526 = vector.broadcast %c2_i32_143 : i32 to vector<4x128xi32>
    %527 = arith.cmpi eq, %518, %526 : vector<4x128xi32>
    %528 = vector.shape_cast %489 : vector<1x128xf32> to vector<1x128xf32>
    %529 = vector.broadcast %528 : vector<1x128xf32> to vector<4x128xf32>
    %530 = arith.select %527, %529, %525 : vector<4x128xi1>, vector<4x128xf32>
    %c3_i32_144 = arith.constant 3 : i32
    %531 = vector.broadcast %c3_i32_144 : i32 to vector<4x128xi32>
    %532 = arith.cmpi eq, %518, %531 : vector<4x128xi32>
    %533 = vector.shape_cast %493 : vector<1x128xf32> to vector<1x128xf32>
    %534 = vector.broadcast %533 : vector<1x128xf32> to vector<4x128xf32>
    %535 = arith.select %532, %534, %530 : vector<4x128xi1>, vector<4x128xf32>
    %c0_145 = arith.constant 0 : index
    %c0_146 = arith.constant 0 : index
    %536 = vector.load %arg9[%c0_145, %c0_146] : memref<4x128xf32, #tpu.memory_space<vmem>>, vector<4x128xf32>
    tpu.vector_store %arg9[%c0_145, %c0_146], %535 {strides = array<i32>} : memref<4x128xf32, #tpu.memory_space<vmem>>, vector<4x128xf32>,
    %537 = tpu.iota {dimensions = array<i32: 0>} : vector<4x128xi32>
    %538 = vector.shape_cast %301 : vector<1x128xf32> to vector<1x128xf32>
    %539 = vector.broadcast %538 : vector<1x128xf32> to vector<4x128xf32>
    %c1_i32_147 = arith.constant 1 : i32
    %540 = vector.broadcast %c1_i32_147 : i32 to vector<4x128xi32>
    %541 = arith.cmpi eq, %537, %540 : vector<4x128xi32>
    %542 = vector.shape_cast %304 : vector<1x128xf32> to vector<1x128xf32>
    %543 = vector.broadcast %542 : vector<1x128xf32> to vector<4x128xf32>
    %544 = arith.select %541, %543, %539 : vector<4x128xi1>, vector<4x128xf32>
    %c2_i32_148 = arith.constant 2 : i32
    %545 = vector.broadcast %c2_i32_148 : i32 to vector<4x128xi32>
    %546 = arith.cmpi eq, %537, %545 : vector<4x128xi32>
    %547 = vector.shape_cast %307 : vector<1x128xf32> to vector<1x128xf32>
    %548 = vector.broadcast %547 : vector<1x128xf32> to vector<4x128xf32>
    %549 = arith.select %546, %548, %544 : vector<4x128xi1>, vector<4x128xf32>
    %c3_i32_149 = arith.constant 3 : i32
    %550 = vector.broadcast %c3_i32_149 : i32 to vector<4x128xi32>
    %551 = arith.cmpi eq, %537, %550 : vector<4x128xi32>
    %552 = vector.shape_cast %309 : vector<1x128xf32> to vector<1x128xf32>
    %553 = vector.broadcast %552 : vector<1x128xf32> to vector<4x128xf32>
    %554 = arith.select %551, %553, %549 : vector<4x128xi1>, vector<4x128xf32>
    %c0_150 = arith.constant 0 : index
    %c0_151 = arith.constant 0 : index
    %555 = vector.load %arg10[%c0_150, %c0_151] : memref<4x128xf32, #tpu.memory_space<vmem>>, vector<4x128xf32>
    tpu.vector_store %arg10[%c0_150, %c0_151], %554 {strides = array<i32>} : memref<4x128xf32, #tpu.memory_space<vmem>>, vector<4x128xf32>,
    %c0_152 = arith.constant 0 : index
    %c0_153 = arith.constant 0 : index
    %556 = vector.load %arg11[%c0_152, %c0_153] : memref<1x128xf32, #tpu.memory_space<vmem>>, vector<1x128xf32>
    tpu.vector_store %arg11[%c0_152, %c0_153], %275 {strides = array<i32>} : memref<1x128xf32, #tpu.memory_space<vmem>>, vector<1x128xf32>,
    return
  }
  func.func @transform_0(%arg0: i32) -> (i32, i32) {
    %c0_i32 = arith.constant 0 : i32
    %c0_i32_0 = arith.constant 0 : i32
    %c0_i32_1 = arith.constant 0 : i32
    return %c0_i32, %c0_i32_0 : i32, i32
  }
  func.func @transform_1(%arg0: i32) -> (i32, i32) {
    %c0_i32 = arith.constant 0 : i32
    %c0_i32_0 = arith.constant 0 : i32
    %c0_i32_1 = arith.constant 0 : i32
    return %c0_i32, %c0_i32_0 : i32, i32
  }
  func.func @transform_2(%arg0: i32) -> (i32, i32) {
    %c0_i32 = arith.constant 0 : i32
    %c0_i32_0 = arith.constant 0 : i32
    %c0_i32_1 = arith.constant 0 : i32
    return %c0_i32, %c0_i32_0 : i32, i32
  }
  func.func @transform_3(%arg0: i32) -> (i32, i32) {
    %c0_i32 = arith.constant 0 : i32
    %c0_i32_0 = arith.constant 0 : i32
    %c0_i32_1 = arith.constant 0 : i32
    return %c0_i32, %c0_i32_0 : i32, i32
  }
  func.func @transform_4(%arg0: i32) -> (i32, i32) {
    %c0_i32 = arith.constant 0 : i32
    %c0_i32_0 = arith.constant 0 : i32
    %c0_i32_1 = arith.constant 0 : i32
    return %c0_i32, %c0_i32_0 : i32, i32
  }
  func.func @transform_5(%arg0: i32) -> (i32, i32) {
    %c0_i32 = arith.constant 0 : i32
    %c0_i32_0 = arith.constant 0 : i32
    %c0_i32_1 = arith.constant 0 : i32
    return %c0_i32, %c0_i32_0 : i32, i32
  }
  func.func @transform_6(%arg0: i32) -> (i32, i32) {
    %c0_i32 = arith.constant 0 : i32
    %c0_i32_0 = arith.constant 0 : i32
    %c0_i32_1 = arith.constant 0 : i32
    return %c0_i32, %c0_i32_0 : i32, i32
  }
  func.func @transform_7(%arg0: i32) -> (i32, i32) {
    %c0_i32 = arith.constant 0 : i32
    %c0_i32_0 = arith.constant 0 : i32
    %c0_i32_1 = arith.constant 0 : i32
    return %c0_i32, %c0_i32_0 : i32, i32
  }
  func.func @transform_8(%arg0: i32) -> (i32, i32) {
    %c0_i32 = arith.constant 0 : i32
    %c0_i32_0 = arith.constant 0 : i32
    %c0_i32_1 = arith.constant 0 : i32
    return %c0_i32, %c0_i32_0 : i32, i32
  }
  func.func @transform_9(%arg0: i32) -> (i32, i32) {
    %c0_i32 = arith.constant 0 : i32
    %c0_i32_0 = arith.constant 0 : i32
    %c0_i32_1 = arith.constant 0 : i32
    return %c0_i32, %c0_i32_0 : i32, i32
  }
  func.func @transform_10(%arg0: i32) -> (i32, i32) {
    %c0_i32 = arith.constant 0 : i32
    %c0_i32_0 = arith.constant 0 : i32
    %c0_i32_1 = arith.constant 0 : i32
    return %c0_i32, %c0_i32_0 : i32, i32
  }
}

</mosaic_0001>

<llo_original>
// kernel: mpm_step.1
$region0: #{mpm_step.1}
  #allocation0 [shape = 'u32[]', space=smem, size = 0x4, offset = 0x4, fixed_abs, tag = 'smem constant byte address 0x4 - core index']
  #allocation1 [shape = 'u32[144,128]{1,0:T(1,128)}', space=vmem, size = 0x12000, scoped, tag = 'internal scratch']
  %s0 = inlined_call_operand.vmem [shape: f32[2,128], index: 0, kind: input, shape index: {}, may-alias: {0,6}]
  %s1 = inlined_call_operand.vmem [shape: f32[2,128], index: 1, kind: input, shape index: {}, may-alias: {1,7}]
  %s2 = inlined_call_operand.vmem [shape: f32[4,128], index: 2, kind: input, shape index: {}, may-alias: {2,8}]
  %s3 = inlined_call_operand.vmem [shape: f32[4,128], index: 3, kind: input, shape index: {}, may-alias: {3,9}]
  %s4 = inlined_call_operand.vmem [shape: s32[1,128], index: 4, kind: input, shape index: {}]
  %s5 = inlined_call_operand.vmem [shape: f32[1,128], index: 5, kind: input, shape index: {}, may-alias: {5,10}]
  %s6 = inlined_call_operand.vmem [shape: f32[2,128], index: 6, kind: output, shape index: {0}, may-alias: {0,6}]
  %s7 = inlined_call_operand.vmem [shape: f32[2,128], index: 7, kind: output, shape index: {1}, may-alias: {1,7}]
  %s8 = inlined_call_operand.vmem [shape: f32[4,128], index: 8, kind: output, shape index: {2}, may-alias: {2,8}]
  %s9 = inlined_call_operand.vmem [shape: f32[4,128], index: 9, kind: output, shape index: {3}, may-alias: {3,9}]
  %s10 = inlined_call_operand.vmem [shape: f32[1,128], index: 10, kind: output, shape index: {4}, may-alias: {5,10}]
  %11 = xla_tuple %s6, %s7, %s8, %s9, %s10
  %s12 = sld [smem:[#allocation0]]
  $region66: #{mpm_step.1} parent=0
    _
  %s14 = ssub.s32 1, %s12
  %s15 = scalar_select 0, %s14, %s12
  // Predicated region
  $region2: #{mpm_step.1} parent=0 // pred_check
    _
  $region3: #{mpm_step.1} parent=0 // pred_check_branch
    %17 = sbr.rel (0) target = $region5
  $region4: #{mpm_step.1} parent=0 // pred_region
    _
  $region5: #{mpm_step.1} parent=0 // pred_fallthru
    _
  // Predicated region
  $region6: #{mpm_step.1} parent=0 // pred_check
    _
  $region7: #{mpm_step.1} parent=0 // pred_check_branch
    %19 = sbr.rel (0) target = $region9
  $region8: #{mpm_step.1} parent=0 // pred_region
    _
  $region9: #{mpm_step.1} parent=0 // pred_fallthru
    _
  // Predicated region
  $region10: #{mpm_step.1} parent=0 // pred_check
    _
  $region11: #{mpm_step.1} parent=0 // pred_check_branch
    %21 = sbr.rel (0) target = $region13
  $region12: #{mpm_step.1} parent=0 // pred_region
    _
  $region13: #{mpm_step.1} parent=0 // pred_fallthru
    _
  // Predicated region
  $region14: #{mpm_step.1} parent=0 // pred_check
    _
  $region15: #{mpm_step.1} parent=0 // pred_check_branch
    %23 = sbr.rel (0) target = $region17
  $region16: #{mpm_step.1} parent=0 // pred_region
    _
  $region17: #{mpm_step.1} parent=0 // pred_fallthru
    _
  // Predicated region
  $region18: #{mpm_step.1} parent=0 // pred_check
    _
  $region19: #{mpm_step.1} parent=0 // pred_check_branch
    %25 = sbr.rel (0) target = $region21
  $region20: #{mpm_step.1} parent=0 // pred_region
    _
  $region21: #{mpm_step.1} parent=0 // pred_fallthru
    _
  // Predicated region
  $region22: #{mpm_step.1} parent=0 // pred_check
    _
  $region23: #{mpm_step.1} parent=0 // pred_check_branch
    %27 = sbr.rel (0) target = $region25
  $region24: #{mpm_step.1} parent=0 // pred_region
    _
  $region25: #{mpm_step.1} parent=0 // pred_fallthru
    _
  %v28 = vld [vmem:[%s4] sm:$0x1]
  %vm29 = vcmp.eq.s32.totalorder %v28, 0
  %vm30 = vcmp.eq.s32.totalorder %v28, 1
  %vm31 = vcmp.eq.s32.totalorder %v28, 2
  %v32 = vlaneseq
  %v33 = vshrl.u32 %v32, 7
  %v34 = vadd.s32 %v33, 8
  %v35 = vlaneseq
  %v36 = vand.u32 %v35, 127
  %v37 = vcvt.s32.f32 %v33
  %v38 = vcvt.s32.f32 %v34
  %v39 = vmul.f32 %v37, 0.0625
  %v40 = vmul.f32 %v38, 0.0625
  %v41 = vcvt.s32.f32 %v36
  %v42 = vmul.f32 %v41, 0.0625
  %v43 = vld [vmem:[%s0] sm:$0x1]
  %v44 = vld [vmem:[%s0 + $0x1] sm:$0x1]
  %v45 = vld [vmem:[%s1] sm:$0x1]
  %v46 = vld [vmem:[%s1 + $0x1] sm:$0x1]
  %v47 = vld [vmem:[%s2] sm:$0x1]
  %v48 = vld [vmem:[%s2 + $0x1] sm:$0x1]
  %v49 = vld [vmem:[%s2 + $0x2] sm:$0x1]
  %v50 = vld [vmem:[%s2 + $0x3] sm:$0x1]
  %v51 = vld [vmem:[%s3] sm:$0x1]
  %v52 = vld [vmem:[%s3 + $0x1] sm:$0x1]
  %v53 = vld [vmem:[%s3 + $0x2] sm:$0x1]
  %v54 = vld [vmem:[%s3 + $0x3] sm:$0x1]
  %v55 = vld [vmem:[%s5] sm:$0x1]
  %v56 = vmul.f32 %v43, 16.0
  %v57 = vsub.f32 %v56, 0.5
  %v58 = vcvt.f32.s32.to.zero.pseudo %v57
  %v59 = vmul.f32 %v44, 16.0
  %v60 = vsub.f32 %v59, 0.5
  %v61 = vcvt.f32.s32.to.zero.pseudo %v60
  %v62 = vcvt.s32.f32 %v58
  %v63 = vsub.f32 %v56, %v62
  %v64 = vcvt.s32.f32 %v61
  %v65 = vsub.f32 %v59, %v64
  %v66 = vsub.f32 1.5, %v63
  %v67 = vmul.f32 %v66, %v66
  %v68 = vmul.f32 %v67, 0.5
  %v69 = vsub.f32 %v63, 1.0
  %v70 = vmul.f32 %v69, %v69
  %v71 = vsub.f32 0.75, %v70
  %v72 = vsub.f32 %v63, 0.5
  %v73 = vmul.f32 %v72, %v72
  %v74 = vmul.f32 %v73, 0.5
  %v75 = vsub.f32 1.5, %v65
  %v76 = vmul.f32 %v75, %v75
  %v77 = vmul.f32 %v76, 0.5
  %v78 = vsub.f32 %v65, 1.0
  %v79 = vmul.f32 %v78, %v78
  %v80 = vsub.f32 0.75, %v79
  %v81 = vsub.f32 %v65, 0.5
  %v82 = vmul.f32 %v81, %v81
  %v83 = vmul.f32 %v82, 0.5
  %v84 = vlaneseq
  %v85 = vshrl.u32 %v84, 7
  %v86 = vsub.s32 0, %v85
  %v87 = vrot.slane %v58, %v86
  %vm88 = vcmp.eq.s32.totalorder %v87, %v33
  %vm89 = vcmp.eq.s32.totalorder %v87, %v34
  %v90 = vlaneseq
  %v91 = vshrl.u32 %v90, 7
  %v92 = vsub.s32 0, %v91
  %v93 = vrot.slane %v68, %v92
  %v94 = vsel %vm88, %v93, 0.0
  %v95 = vsel %vm89, %v93, 0.0
  %v96 = vadd.f32 %v94, 0.0
  %v97 = vadd.f32 %v95, 0.0
  %v98 = vlaneseq
  %v99 = vshrl.u32 %v98, 7
  %v100 = vsub.s32 0, %v99
  %v101 = vrot.slane %v61, %v100
  %vm102 = vcmp.eq.s32.totalorder %v101, %v33
  %vm103 = vcmp.eq.s32.totalorder %v101, %v34
  %v104 = vlaneseq
  %v105 = vshrl.u32 %v104, 7
  %v106 = vsub.s32 0, %v105
  %v107 = vrot.slane %v77, %v106
  %v108 = vsel %vm102, %v107, 0.0
  %v109 = vsel %vm103, %v107, 0.0
  %v110 = vadd.f32 %v108, 0.0
  %v111 = vadd.f32 %v109, 0.0
  %v112 = vadd.s32 %v58, 1
  %v113 = vlaneseq
  %v114 = vshrl.u32 %v113, 7
  %v115 = vsub.s32 0, %v114
  %v116 = vrot.slane %v112, %v115
  %vm117 = vcmp.eq.s32.totalorder %v116, %v33
  %vm118 = vcmp.eq.s32.totalorder %v116, %v34
  %v119 = vlaneseq
  %v120 = vshrl.u32 %v119, 7
  %v121 = vsub.s32 0, %v120
  %v122 = vrot.slane %v71, %v121
  %v123 = vsel %vm117, %v122, 0.0
  %v124 = vsel %vm118, %v122, 0.0
  %v125 = vadd.f32 %v96, %v123
  %v126 = vadd.f32 %v97, %v124
  %v127 = vadd.s32 %v61, 1
  %v128 = vlaneseq
  %v129 = vshrl.u32 %v128, 7
  %v130 = vsub.s32 0, %v129
  %v131 = vrot.slane %v127, %v130
  %vm132 = vcmp.eq.s32.totalorder %v131, %v33
  %vm133 = vcmp.eq.s32.totalorder %v131, %v34
  %v134 = vlaneseq
  %v135 = vshrl.u32 %v134, 7
  %v136 = vsub.s32 0, %v135
  %v137 = vrot.slane %v80, %v136
  %v138 = vsel %vm132, %v137, 0.0
  %v139 = vsel %vm133, %v137, 0.0
  %v140 = vadd.f32 %v110, %v138
  %v141 = vadd.f32 %v111, %v139
  %v142 = vadd.s32 %v58, 2
  %v143 = vlaneseq
  %v144 = vshrl.u32 %v143, 7
  %v145 = vsub.s32 0, %v144
  %v146 = vrot.slane %v142, %v145
  %vm147 = vcmp.eq.s32.totalorder %v146, %v33
  %vm148 = vcmp.eq.s32.totalorder %v146, %v34
  %v149 = vlaneseq
  %v150 = vshrl.u32 %v149, 7
  %v151 = vsub.s32 0, %v150
  %v152 = vrot.slane %v74, %v151
  %v153 = vsel %vm147, %v152, 0.0
  %v154 = vsel %vm148, %v152, 0.0
  %v155 = vadd.f32 %v125, %v153
  %v156 = vadd.f32 %v126, %v154
  %v157 = vadd.s32 %v61, 2
  %v158 = vlaneseq
  %v159 = vshrl.u32 %v158, 7
  %v160 = vsub.s32 0, %v159
  %v161 = vrot.slane %v157, %v160
  %vm162 = vcmp.eq.s32.totalorder %v161, %v33
  %vm163 = vcmp.eq.s32.totalorder %v161, %v34
  %v164 = vlaneseq
  %v165 = vshrl.u32 %v164, 7
  %v166 = vsub.s32 0, %v165
  %v167 = vrot.slane %v83, %v166
  %v168 = vsel %vm162, %v167, 0.0
  %v169 = vsel %vm163, %v167, 0.0
  %v170 = vadd.f32 %v140, %v168
  %v171 = vadd.f32 %v141, %v169
  %v172 = vmul.f32 %v47, %v51
  %v173 = vmul.f32 %v48, %v53
  %v174 = vadd.f32 %v172, %v173
  %v175 = vmul.f32 %v174, 0.0001
  %v176 = vadd.f32 %v51, %v175
  %v177 = vmul.f32 %v47, %v52
  %v178 = vmul.f32 %v48, %v54
  %v179 = vadd.f32 %v177, %v178
  %v180 = vmul.f32 %v179, 0.0001
  %v181 = vadd.f32 %v52, %v180
  %v182 = vmul.f32 %v49, %v51
  %v183 = vmul.f32 %v50, %v53
  %v184 = vadd.f32 %v182, %v183
  %v185 = vmul.f32 %v184, 0.0001
  %v186 = vadd.f32 %v53, %v185
  %v187 = vmul.f32 %v49, %v52
  %v188 = vmul.f32 %v50, %v54
  %v189 = vadd.f32 %v187, %v188
  %v190 = vmul.f32 %v189, 0.0001
  %v191 = vadd.f32 %v54, %v190
  %v192 = vsub.f32 1.0, %v55
  %v193 = vmul.f32 %v192, 10.0
  %v194 = vmul.f32 %v193, 1.442695
  %v195 = vpow.pop %v194
  %v196 = vsel %vm30, 0.3, %v195
  %v197 = vmul.f32 %v196, 416.66666
  %v198 = vsel %vm29, 0.0, %v197
  %v199 = vmul.f32 %v196, 277.77777
  %v200 = vmul.f32 %v176, %v176
  %v201 = vmul.f32 %v186, %v186
  %v202 = vadd.f32 %v200, %v201
  %v203 = vmul.f32 %v176, %v181
  %v204 = vmul.f32 %v186, %v191
  %v205 = vadd.f32 %v203, %v204
  %v206 = vmul.f32 %v181, %v181
  %v207 = vmul.f32 %v191, %v191
  %v208 = vadd.f32 %v206, %v207
  %v209 = vadd.f32 %v202, %v208
  %v210 = vsub.f32 %v202, %v208
  %v211 = vmul.f32 %v210, %v210
  %v212 = vmul.f32 %v205, 4.0
  %v213 = vmul.f32 %v212, %v205
  %v214 = vadd.f32 %v211, %v213
  %v215 = vrsqrt.pop %v214
  %v216 = vmul.f32 %v214, %v215
  %vm217 = vcmp.eq.f32.partialorder %v214, inf
  %v218 = vsel %vm217, %v214, %v216
  %vm219 = vcmp.eq.f32.partialorder %v214, 0.0
  %v220 = vand.u32 %v214, 2147483648
  %v221 = vsel %vm219, %v220, %v218
  %v222 = vadd.f32 %v209, %v221
  %v223 = vmul.f32 %v222, 0.5
  %v224 = vmax.f32 %v223, 0.0
  %v225 = vrsqrt.pop %v224
  %v226 = vmul.f32 %v224, %v225
  %vm227 = vcmp.eq.f32.partialorder %v224, inf
  %v228 = vsel %vm227, %v224, %v226
  %vm229 = vcmp.eq.f32.partialorder %v224, 0.0
  %v230 = vand.u32 %v224, 2147483648
  %v231 = vsel %vm229, %v230, %v228
  %v232 = vsub.f32 %v209, %v221
  %v233 = vmul.f32 %v232, 0.5
  %v234 = vmax.f32 %v233, 0.0
  %v235 = vrsqrt.pop %v234
  %v236 = vmul.f32 %v234, %v235
  %vm237 = vcmp.eq.f32.partialorder %v234, inf
  %v238 = vsel %vm237, %v234, %v236
  %vm239 = vcmp.eq.f32.partialorder %v234, 0.0
  %v240 = vand.u32 %v234, 2147483648
  %v241 = vsel %vm239, %v240, %v238
  %v242 = vmax.f32 %v221, 1e-12
  %vm243 = vcmp.gt.f32.partialorder %v221, 1e-12
  %v244 = vrcp.pop %v242
  %v245 = vmul.f32 %v210, %v244
  %v246 = vsel %vm243, %v245, 1.0
  %v247 = vmul.f32 %v205, 2.0
  %v248 = vmul.f32 %v247, %v244
  %v249 = vsel %vm243, %v248, 0.0
  %v250 = vadd.f32 %v246, 1.0
  %v251 = vmul.f32 %v250, 0.5
  %v252 = vmax.f32 %v251, 0.0
  %v253 = vrsqrt.pop %v252
  %v254 = vmul.f32 %v252, %v253
  %vm255 = vcmp.eq.f32.partialorder %v252, inf
  %v256 = vsel %vm255, %v252, %v254
  %vm257 = vcmp.eq.f32.partialorder %v252, 0.0
  %v258 = vand.u32 %v252, 2147483648
  %v259 = vsel %vm257, %v258, %v256
  %vm260 = vcmp.gt.f32.partialorder %v259, 1e-06
  %v261 = vmax.f32 %v259, 1e-06
  %v262 = vmul.f32 %v261, 2.0
  %v263 = vrcp.pop %v262
  %v264 = vmul.f32 %v249, %v263
  %v265 = vsel %vm260, %v264, 1.0
  %v266 = vmax.f32 %v231, 1e-12
  %v267 = vrcp.pop %v266
  %v268 = vmul.f32 1.0, %v267
  %v269 = vmax.f32 %v241, 1e-12
  %v270 = vrcp.pop %v269
  %v271 = vmul.f32 1.0, %v270
  %v272 = vmul.f32 %v176, %v259
  %v273 = vmul.f32 %v181, %v265
  %v274 = vadd.f32 %v272, %v273
  %v275 = vmul.f32 %v274, %v268
  %v276 = vmul.f32 %v186, %v259
  %v277 = vmul.f32 %v191, %v265
  %v278 = vadd.f32 %v276, %v277
  %v279 = vmul.f32 %v278, %v268
  %v280 = vmul.f32 %v181, %v259
  %v281 = vmul.f32 %v176, %v265
  %v282 = vsub.f32 %v280, %v281
  %v283 = vmul.f32 %v282, %v271
  %v284 = vmul.f32 %v191, %v259
  %v285 = vmul.f32 %v186, %v265
  %v286 = vsub.f32 %v284, %v285
  %v287 = vmul.f32 %v286, %v271
  %v288 = vmax.f32 %v231, 0.975
  %v289 = vmin.f32 %v288, 1.0045
  %v290 = vmax.f32 %v241, 0.975
  %v291 = vmin.f32 %v290, 1.0045
  %v292 = vrcp.pop %v289
  %v293 = vmul.f32 %v231, %v292
  %v294 = vmul.f32 %v55, %v293
  %v295 = vrcp.pop %v291
  %v296 = vmul.f32 %v241, %v295
  %v297 = vmul.f32 %v294, %v296
  %v298 = vsel %vm31, %v297, %v55
  %v299 = vsel %vm31, %v289, %v231
  %v300 = vsel %vm31, %v291, %v241
  %v301 = vmul.f32 %v299, %v300
  %v302 = vrsqrt.pop %v301
  %v303 = vmul.f32 %v301, %v302
  %vm304 = vcmp.eq.f32.partialorder %v301, inf
  %v305 = vsel %vm304, %v301, %v303
  %vm306 = vcmp.eq.f32.partialorder %v301, 0.0
  %v307 = vand.u32 %v301, 2147483648
  %v308 = vsel %vm306, %v307, %v305
  %v309 = vmul.f32 %v275, %v299
  %v310 = vmul.f32 %v309, %v259
  %v311 = vmul.f32 %v283, %v300
  %v312 = vmul.f32 %v311, %v265
  %v313 = vsub.f32 %v310, %v312
  %v314 = vmul.f32 %v309, %v265
  %v315 = vmul.f32 %v311, %v259
  %v316 = vadd.f32 %v314, %v315
  %v317 = vmul.f32 %v279, %v299
  %v318 = vmul.f32 %v317, %v259
  %v319 = vmul.f32 %v287, %v300
  %v320 = vmul.f32 %v319, %v265
  %v321 = vsub.f32 %v318, %v320
  %v322 = vmul.f32 %v317, %v265
  %v323 = vmul.f32 %v319, %v259
  %v324 = vadd.f32 %v322, %v323
  %v325 = vsel %vm31, %v313, %v176
  %v326 = vsel %vm29, %v308, %v325
  %v327 = vsel %vm31, %v316, %v181
  %v328 = vsel %vm29, 0.0, %v327
  %v329 = vsel %vm31, %v321, %v186
  %v330 = vsel %vm29, 0.0, %v329
  %v331 = vsel %vm31, %v324, %v191
  %v332 = vsel %vm29, %v308, %v331
  %v333 = vmul.f32 %v275, %v259
  %v334 = vmul.f32 %v283, %v265
  %v335 = vsub.f32 %v333, %v334
  %v336 = vsub.f32 %v326, %v335
  %v337 = vmul.f32 %v275, %v265
  %v338 = vmul.f32 %v283, %v259
  %v339 = vadd.f32 %v337, %v338
  %v340 = vsub.f32 %v328, %v339
  %v341 = vmul.f32 %v279, %v259
  %v342 = vmul.f32 %v287, %v265
  %v343 = vsub.f32 %v341, %v342
  %v344 = vsub.f32 %v330, %v343
  %v345 = vmul.f32 %v279, %v265
  %v346 = vmul.f32 %v287, %v259
  %v347 = vadd.f32 %v345, %v346
  %v348 = vsub.f32 %v332, %v347
  %v349 = vmul.f32 %v199, %v301
  %v350 = vsub.f32 %v301, 1.0
  %v351 = vmul.f32 %v349, %v350
  %v352 = vmul.f32 %v198, 2.0
  %v353 = vmul.f32 %v336, %v326
  %v354 = vmul.f32 %v340, %v328
  %v355 = vadd.f32 %v353, %v354
  %v356 = vmul.f32 %v352, %v355
  %v357 = vadd.f32 %v356, %v351
  %v358 = vmul.f32 %v357, -0.0001
  %v359 = vmul.f32 %v47, 0.0009765625
  %v360 = vadd.f32 %v358, %v359
  %v361 = vmul.f32 %v336, %v330
  %v362 = vmul.f32 %v340, %v332
  %v363 = vadd.f32 %v361, %v362
  %v364 = vmul.f32 %v352, %v363
  %v365 = vmul.f32 %v364, -0.0001
  %v366 = vmul.f32 %v48, 0.0009765625
  %v367 = vadd.f32 %v365, %v366
  %v368 = vmul.f32 %v344, %v326
  %v369 = vmul.f32 %v348, %v328
  %v370 = vadd.f32 %v368, %v369
  %v371 = vmul.f32 %v352, %v370
  %v372 = vmul.f32 %v371, -0.0001
  %v373 = vmul.f32 %v49, 0.0009765625
  %v374 = vadd.f32 %v372, %v373
  %v375 = vmul.f32 %v344, %v330
  %v376 = vmul.f32 %v348, %v332
  %v377 = vadd.f32 %v375, %v376
  %v378 = vmul.f32 %v352, %v377
  %v379 = vadd.f32 %v378, %v351
  %v380 = vmul.f32 %v379, -0.0001
  %v381 = vmul.f32 %v50, 0.0009765625
  %v382 = vadd.f32 %v380, %v381
  %v383 = vmul.f32 %v45, 0.0009765625
  %v384 = vmul.f32 %v360, %v43
  %v385 = vmul.f32 %v367, %v44
  %v386 = vadd.f32 %v384, %v385
  %v387 = vsub.f32 %v383, %v386
  %v388 = vmul.f32 %v46, 0.0009765625
  %v389 = vmul.f32 %v374, %v43
  %v390 = vmul.f32 %v382, %v44
  %v391 = vadd.f32 %v389, %v390
  %v392 = vsub.f32 %v388, %v391
  %v393 = vlaneseq
  %v394 = vshrl.u32 %v393, 7
  %v395 = vsub.s32 0, %v394
  %v396 = vrot.slane %v387, %v395
  %v397 = vmul.f32 %v155, %v396
  %v398 = vmul.f32 %v156, %v396
  %v399 = vlaneseq
  %v400 = vshrl.u32 %v399, 7
  %v401 = vsub.s32 0, %v400
  %v402 = vrot.slane %v392, %v401
  %v403 = vmul.f32 %v155, %v402
  %v404 = vmul.f32 %v156, %v402
  %v406 = vlaneseq
  %v407 = vshrl.u32 %v406, 7
  %v408 = vsub.s32 0, %v407
  %v409 = vrot.slane %v360, %v408
  %v411 = vmul.f32 %v155, %v409
  %v412 = vmul.f32 %v156, %v409
  %v414 = vlaneseq
  %v415 = vshrl.u32 %v414, 7
  %v416 = vsub.s32 0, %v415
  %v417 = vrot.slane %v367, %v416
  %v419 = vmul.f32 %v155, %v417
  %v420 = vmul.f32 %v156, %v417
  %v422 = vlaneseq
  %v423 = vshrl.u32 %v422, 7
  %v424 = vsub.s32 0, %v423
  %v425 = vrot.slane %v374, %v424
  %v427 = vmul.f32 %v155, %v425
  %v428 = vmul.f32 %v156, %v425
  %v430 = vlaneseq
  %v431 = vshrl.u32 %v430, 7
  %v432 = vsub.s32 0, %v431
  %v433 = vrot.slane %v382, %v432
  %v435 = vmul.f32 %v155, %v433
  %v436 = vmul.f32 %v156, %v433
  %437 = vmatprep.subr.mxu0 0.0
  %438 = vmatpush1.xpose.msra.mxu0 %v170
  %439 = vmatprep.subr.mxu0 0.0
  %440 = vmatpush1.xpose.msra.mxu0 %v171
  %441 = vmatprep.subr.mxu0 0.0
  %442 = vmatpush1.xpose.msra.mxu0 0.0
  %443 = vmatprep.subr.mxu0 0.0
  %444 = vmatpush1.xpose.msra.mxu0 0.0
  %445 = vmatprep.subr.mxu0 0.0
  %446 = vmatpush1.xpose.msra.mxu0 0.0
  %447 = vmatprep.subr.mxu0 0.0
  %448 = vmatpush1.xpose.msra.mxu0 0.0
  %449 = vmatprep.subr.mxu0 0.0
  %450 = vmatpush1.xpose.msra.mxu0 0.0
  %451 = vmatprep.subr.mxu0 0.0
  %452 = vmatpush1.xpose.msra.mxu0 0.0
  %453 = vmatprep.subr.mxu0 0.0
  %454 = vmatpush1.xpose.msra.mxu0 0.0
  %455 = vmatprep.subr.mxu0 0.0
  %456 = vmatpush1.xpose.msra.mxu0 0.0
  %457 = vmatprep.subr.mxu0 0.0
  %458 = vmatpush1.xpose.msra.mxu0 0.0
  %459 = vmatprep.subr.mxu0 0.0
  %460 = vmatpush1.xpose.msra.mxu0 0.0
  %461 = vmatprep.subr.mxu0 0.0
  %462 = vmatpush1.xpose.msra.mxu0 0.0
  %463 = vmatprep.subr.mxu0 0.0
  %464 = vmatpush1.xpose.msra.mxu0 0.0
  %465 = vmatprep.subr.mxu0 0.0
  %466 = vmatpush1.xpose.msra.mxu0 0.0
  %467 = vmatprep.subr.mxu0 0.0
  %468 = vmatpush1.xpose.msra.mxu0 0.0
  %469 = vmatprep.subr.mxu0 0.0
  %470 = vmatpush1.xpose.msra.mxu0 0.0
  %471 = vmatprep.subr.mxu0 0.0
  %472 = vmatpush1.xpose.msra.mxu0 0.0
  %473 = vmatprep.subr.mxu0 0.0
  %474 = vmatpush1.xpose.msra.mxu0 0.0
  %475 = vmatprep.subr.mxu0 0.0
  %476 = vmatpush1.xpose.msra.mxu0 0.0
  %477 = vmatprep.subr.mxu0 0.0
  %478 = vmatpush1.xpose.msra.mxu0 0.0
  %479 = vmatprep.subr.mxu0 0.0
  %480 = vmatpush1.xpose.msra.mxu0 0.0
  %481 = vmatprep.subr.mxu0 0.0
  %482 = vmatpush1.xpose.msra.mxu0 0.0
  %483 = vmatprep.subr.mxu0 0.0
  %484 = vmatpush1.xpose.msra.mxu0 0.0
  %485 = vmatprep.subr.mxu0 0.0
  %486 = vmatpush1.xpose.msra.mxu0 0.0
  %487 = vmatprep.subr.mxu0 0.0
  %488 = vmatpush1.xpose.msra.mxu0 0.0
  %489 = vmatprep.subr.mxu0 0.0
  %490 = vmatpush1.xpose.msra.mxu0 0.0
  %491 = vmatprep.subr.mxu0 0.0
  %492 = vmatpush1.xpose.msra.mxu0 0.0
  %493 = vmatprep.subr.mxu0 0.0
  %494 = vmatpush1.xpose.msra.mxu0 0.0
  %495 = vmatprep.subr.mxu0 0.0
  %496 = vmatpush1.xpose.msra.mxu0 0.0
  %497 = vmatprep.subr.mxu0 0.0
  %498 = vmatpush1.xpose.msra.mxu0 0.0
  %499 = vmatprep.subr.mxu0 0.0
  %500 = vmatpush1.xpose.msra.mxu0 0.0
  %501 = vmatprep.mubr.f32.mxu0 0.0
  %502 = vmatmul.mubr.f32.gmra.mrb[0].mxu0 %v397
  %v503 = vpop.f32.mrb[0].mxu0
  %v504 = vadd.f32 0.0, %v503
  %v505 = vpop.f32.mrb[0].mxu0
  %506 = vmatprep.mubr.f32.mxu0 0.0
  %507 = vmatmul.mubr.f32.gmra.mrb[0].mxu0 %v398
  %v508 = vpop.f32.mrb[0].mxu0
  %v509 = vadd.f32 0.0, %v508
  %v510 = vpop.f32.mrb[0].mxu0
  %511 = vmatprep.mubr.f32.mxu0 0.0
  %512 = vmatmul.mubr.f32.gmra.mrb[0].mxu0 %v403
  %v513 = vpop.f32.mrb[0].mxu0
  %v514 = vadd.f32 0.0, %v513
  %v515 = vpop.f32.mrb[0].mxu0
  %516 = vmatprep.mubr.f32.mxu0 0.0
  %517 = vmatmul.mubr.f32.gmra.mrb[0].mxu0 %v404
  %v518 = vpop.f32.mrb[0].mxu0
  %v519 = vadd.f32 0.0, %v518
  %v520 = vpop.f32.mrb[0].mxu0
  %521 = vmatprep.mubr.f32.mxu0 0.0
  %522 = vmatmul.mubr.f32.gmra.mrb[0].mxu0 %v411
  %v523 = vpop.f32.mrb[0].mxu0
  %v524 = vadd.f32 0.0, %v523
  %v525 = vpop.f32.mrb[0].mxu0
  %526 = vmatprep.mubr.f32.mxu0 0.0
  %527 = vmatmul.mubr.f32.gmra.mrb[0].mxu0 %v412
  %v528 = vpop.f32.mrb[0].mxu0
  %v529 = vadd.f32 0.0, %v528
  %v530 = vpop.f32.mrb[0].mxu0
  %531 = vmatprep.mubr.f32.mxu0 0.0
  %532 = vmatmul.mubr.f32.gmra.mrb[0].mxu0 %v419
  %v533 = vpop.f32.mrb[0].mxu0
  %v534 = vadd.f32 0.0, %v533
  %v535 = vpop.f32.mrb[0].mxu0
  %536 = vmatprep.mubr.f32.mxu0 0.0
  %537 = vmatmul.mubr.f32.gmra.mrb[0].mxu0 %v420
  %v538 = vpop.f32.mrb[0].mxu0
  %v539 = vadd.f32 0.0, %v538
  %v540 = vpop.f32.mrb[0].mxu0
  %541 = vmatprep.mubr.f32.mxu0 0.0
  %542 = vmatmul.mubr.f32.gmra.mrb[0].mxu0 %v427
  %v543 = vpop.f32.mrb[0].mxu0
  %v544 = vadd.f32 0.0, %v543
  %v545 = vpop.f32.mrb[0].mxu0
  %546 = vmatprep.mubr.f32.mxu0 0.0
  %547 = vmatmul.mubr.f32.gmra.mrb[0].mxu0 %v428
  %v548 = vpop.f32.mrb[0].mxu0
  %v549 = vadd.f32 0.0, %v548
  %v550 = vpop.f32.mrb[0].mxu0
  %551 = vmatprep.mubr.f32.mxu0 0.0
  %552 = vmatmul.mubr.f32.gmra.mrb[0].mxu0 %v435
  %v553 = vpop.f32.mrb[0].mxu0
  %v554 = vadd.f32 0.0, %v553
  %v555 = vpop.f32.mrb[0].mxu0
  %556 = vmatprep.mubr.f32.mxu0 0.0
  %557 = vmatmul.mubr.f32.gmra.mrb[0].mxu0 %v436
  %v558 = vpop.f32.mrb[0].mxu0
  %v559 = vadd.f32 0.0, %v558
  %v560 = vpop.f32.mrb[0].mxu0
  %561 = vmatprep.mubr.f32.mxu0 0.0
  %562 = vmatmul.mubr.f32.gmra.mrb[0].mxu0 %v155
  %v563 = vpop.f32.mrb[0].mxu0
  %v564 = vadd.f32 0.0, %v563
  %v565 = vpop.f32.mrb[0].mxu0
  %566 = vmatprep.mubr.f32.mxu0 0.0
  %567 = vmatmul.mubr.f32.gmra.mrb[0].mxu0 %v156
  %v568 = vpop.f32.mrb[0].mxu0
  %v569 = vadd.f32 0.0, %v568
  %v570 = vpop.f32.mrb[0].mxu0
  %571 = vdwg.mxu0
  %v572 = vmul.f32 %v564, 0.0009765625
  %v573 = vmul.f32 %v569, 0.0009765625
  %v574 = vmul.f32 %v524, %v39
  %v575 = vmul.f32 %v529, %v40
  %v576 = vadd.f32 %v504, %v574
  %v577 = vadd.f32 %v509, %v575
  %v578 = vmul.f32 %v534, %v42
  %v579 = vmul.f32 %v539, %v42
  %v580 = vadd.f32 %v576, %v578
  %v581 = vadd.f32 %v577, %v579
  %v582 = vmul.f32 %v544, %v39
  %v583 = vmul.f32 %v549, %v40
  %v584 = vadd.f32 %v514, %v582
  %v585 = vadd.f32 %v519, %v583
  %v586 = vmul.f32 %v554, %v42
  %v587 = vmul.f32 %v559, %v42
  %v588 = vadd.f32 %v584, %v586
  %v589 = vadd.f32 %v585, %v587
  %vm590 = vcmp.gt.f32.partialorder %v572, 0.0
  %vm591 = vcmp.gt.f32.partialorder %v573, 0.0
  %v592 = vsel %vm590, %v572, 1.0
  %v593 = vsel %vm591, %v573, 1.0
  %v594 = vrcp.pop %v592
  %v595 = vmul.f32 1.0, %v594
  %v596 = vrcp.pop %v593
  %v597 = vmul.f32 1.0, %v596
  %v598 = vmul.f32 %v580, %v595
  %v599 = vmul.f32 %v581, %v597
  %v600 = vsel %vm590, %v598, %v580
  %v601 = vsel %vm591, %v599, %v581
  %v602 = vmul.f32 %v588, %v595
  %v603 = vmul.f32 %v589, %v597
  %v604 = vsel %vm590, %v602, %v588
  %v605 = vsel %vm591, %v603, %v589
  %v606 = vsub.f32 %v604, 0.005
  %v607 = vsub.f32 %v605, 0.005
  %vm608 = vcmp.lt.s32.totalorder %v33, 3
  %vm609 = vcmp.lt.s32.totalorder %v34, 3
  %v610 = vmax.f32 %v600, 0.0
  %v611 = vmax.f32 %v601, 0.0
  %v612 = vsel %vm608, %v610, %v600
  %v613 = vsel %vm609, %v611, %v601
  %vm614 = vcmp.ge.s32.totalorder %v33, 14
  %vm615 = vcmp.ge.s32.totalorder %v34, 14
  %v616 = vmin.f32 %v612, 0.0
  %v617 = vmin.f32 %v613, 0.0
  %v618 = vsel %vm614, %v616, %v612
  %v619 = vsel %vm615, %v617, %v613
  %vm620 = vcmp.lt.s32.totalorder %v36, 3
  %v621 = vmax.f32 %v606, 0.0
  %v622 = vmax.f32 %v607, 0.0
  %v623 = vsel %vm620, %v621, %v606
  %v624 = vsel %vm620, %v622, %v607
  %vm625 = vcmp.ge.s32.totalorder %v36, 14
  %v626 = vmin.f32 %v623, 0.0
  %v627 = vmin.f32 %v624, 0.0
  %v628 = vsel %vm625, %v626, %v623
  %v629 = vsel %vm625, %v627, %v624
  %v630 = vmul.f32 %v618, %v42
  %v631 = vmul.f32 %v619, %v42
  %v632 = vmul.f32 %v628, %v42
  %v633 = vmul.f32 %v629, %v42
  %vm634 = vcmask 130048
  %v636 = vsel %vm634, %v618, 0
  %v639 = vsel %vm634, %v619, 0
  %v642 = vsel %vm634, %v628, 0
  %v645 = vsel %vm634, %v629, 0
  %v648 = vsel %vm634, %v630, 0
  %v651 = vsel %vm634, %v631, 0
  %v654 = vsel %vm634, %v632, 0
  %v657 = vsel %vm634, %v633, 0
  %659 = vmatprep.subr.mxu0 0.0
  %660 = vmatpush1.msra.mxu0 %v170
  %661 = vmatprep.subr.mxu0 0.0
  %662 = vmatpush1.msra.mxu0 %v171
  %663 = vmatprep.subr.mxu0 0.0
  %664 = vmatpush1.msra.mxu0 0.0
  %665 = vmatprep.subr.mxu0 0.0
  %666 = vmatpush1.msra.mxu0 0.0
  %667 = vmatprep.subr.mxu0 0.0
  %668 = vmatpush1.msra.mxu0 0.0
  %669 = vmatprep.subr.mxu0 0.0
  %670 = vmatpush1.msra.mxu0 0.0
  %671 = vmatprep.subr.mxu0 0.0
  %672 = vmatpush1.msra.mxu0 0.0
  %673 = vmatprep.subr.mxu0 0.0
  %674 = vmatpush1.msra.mxu0 0.0
  %675 = vmatprep.subr.mxu0 0.0
  %676 = vmatpush1.msra.mxu0 0.0
  %677 = vmatprep.subr.mxu0 0.0
  %678 = vmatpush1.msra.mxu0 0.0
  %679 = vmatprep.subr.mxu0 0.0
  %680 = vmatpush1.msra.mxu0 0.0
  %681 = vmatprep.subr.mxu0 0.0
  %682 = vmatpush1.msra.mxu0 0.0
  %683 = vmatprep.subr.mxu0 0.0
  %684 = vmatpush1.msra.mxu0 0.0
  %685 = vmatprep.subr.mxu0 0.0
  %686 = vmatpush1.msra.mxu0 0.0
  %687 = vmatprep.subr.mxu0 0.0
  %688 = vmatpush1.msra.mxu0 0.0
  %689 = vmatprep.subr.mxu0 0.0
  %690 = vmatpush1.msra.mxu0 0.0
  %691 = vmatprep.subr.mxu0 0.0
  %692 = vmatpush1.msra.mxu0 0.0
  %693 = vmatprep.subr.mxu0 0.0
  %694 = vmatpush1.msra.mxu0 0.0
  %695 = vmatprep.subr.mxu0 0.0
  %696 = vmatpush1.msra.mxu0 0.0
  %697 = vmatprep.subr.mxu0 0.0
  %698 = vmatpush1.msra.mxu0 0.0
  %699 = vmatprep.subr.mxu0 0.0
  %700 = vmatpush1.msra.mxu0 0.0
  %701 = vmatprep.subr.mxu0 0.0
  %702 = vmatpush1.msra.mxu0 0.0
  %703 = vmatprep.subr.mxu0 0.0
  %704 = vmatpush1.msra.mxu0 0.0
  %705 = vmatprep.subr.mxu0 0.0
  %706 = vmatpush1.msra.mxu0 0.0
  %707 = vmatprep.subr.mxu0 0.0
  %708 = vmatpush1.msra.mxu0 0.0
  %709 = vmatprep.subr.mxu0 0.0
  %710 = vmatpush1.msra.mxu0 0.0
  %711 = vmatprep.subr.mxu0 0.0
  %712 = vmatpush1.msra.mxu0 0.0
  %713 = vmatprep.subr.mxu0 0.0
  %714 = vmatpush1.msra.mxu0 0.0
  %715 = vmatprep.subr.mxu0 0.0
  %716 = vmatpush1.msra.mxu0 0.0
  %717 = vmatprep.subr.mxu0 0.0
  %718 = vmatpush1.msra.mxu0 0.0
  %719 = vmatprep.subr.mxu0 0.0
  %720 = vmatpush1.msra.mxu0 0.0
  %721 = vmatprep.subr.mxu0 0.0
  %722 = vmatpush1.msra.mxu0 0.0
  %723 = vmatprep.mubr.f32.mxu0 0.0
  %724 = vmatmul.mubr.f32.gmra.mrb[0].mxu0 %v636
  %v725 = vpop.f32.mrb[0].mxu0
  %v726 = vadd.f32 0.0, %v725
  %v727 = vpop.f32.mrb[0].mxu0
  %728 = vmatprep.mubr.f32.mxu0 0.0
  %729 = vmatmul.mubr.f32.gmra.mrb[0].mxu0 %v639
  %v730 = vpop.f32.mrb[0].mxu0
  %v731 = vadd.f32 0.0, %v730
  %v732 = vpop.f32.mrb[0].mxu0
  %733 = vmatprep.mubr.f32.mxu0 0.0
  %734 = vmatmul.mubr.f32.gmra.mrb[0].mxu0 %v642
  %v735 = vpop.f32.mrb[0].mxu0
  %v736 = vadd.f32 0.0, %v735
  %v737 = vpop.f32.mrb[0].mxu0
  %738 = vmatprep.mubr.f32.mxu0 0.0
  %739 = vmatmul.mubr.f32.gmra.mrb[0].mxu0 %v645
  %v740 = vpop.f32.mrb[0].mxu0
  %v741 = vadd.f32 0.0, %v740
  %v742 = vpop.f32.mrb[0].mxu0
  %743 = vmatprep.mubr.f32.mxu0 0.0
  %744 = vmatmul.mubr.f32.gmra.mrb[0].mxu0 %v648
  %v745 = vpop.f32.mrb[0].mxu0
  %v746 = vadd.f32 0.0, %v745
  %v747 = vpop.f32.mrb[0].mxu0
  %748 = vmatprep.mubr.f32.mxu0 0.0
  %749 = vmatmul.mubr.f32.gmra.mrb[0].mxu0 %v651
  %v750 = vpop.f32.mrb[0].mxu0
  %v751 = vadd.f32 0.0, %v750
  %v752 = vpop.f32.mrb[0].mxu0
  %753 = vmatprep.mubr.f32.mxu0 0.0
  %754 = vmatmul.mubr.f32.gmra.mrb[0].mxu0 %v654
  %v755 = vpop.f32.mrb[0].mxu0
  %v756 = vadd.f32 0.0, %v755
  %v757 = vpop.f32.mrb[0].mxu0
  %758 = vmatprep.mubr.f32.mxu0 0.0
  %759 = vmatmul.mubr.f32.gmra.mrb[0].mxu0 %v657
  %v760 = vpop.f32.mrb[0].mxu0
  %v761 = vadd.f32 0.0, %v760
  %v762 = vpop.f32.mrb[0].mxu0
  %763 = vdwg.mxu0
  %v764 = vmul.f32 %v155, %v39
  %v765 = vmul.f32 %v156, %v40
  %v766 = vmul.f32 %v155, %v726
  %v767 = vmul.f32 %v156, %v731
  %v768 = vadd.f32 %v766, %v767
  %v769 = vrot.slane %v768, 4
  %v770 = vadd.f32 %v768, %v769
  %v771 = vrot.slane %v770, 2
  %v772 = vadd.f32 %v770, %v771
  %v773 = vrot.slane %v772, 1
  %v774 = vadd.f32 %v772, %v773
  %v775 = vmul.f32 %v155, %v736
  %v776 = vmul.f32 %v156, %v741
  %v777 = vadd.f32 %v775, %v776
  %v778 = vrot.slane %v777, 4
  %v779 = vadd.f32 %v777, %v778
  %v780 = vrot.slane %v779, 2
  %v781 = vadd.f32 %v779, %v780
  %v782 = vrot.slane %v781, 1
  %v783 = vadd.f32 %v781, %v782
  %v784 = vmul.f32 %v764, %v726
  %v785 = vmul.f32 %v765, %v731
  %v786 = vadd.f32 %v784, %v785
  %v787 = vrot.slane %v786, 4
  %v788 = vadd.f32 %v786, %v787
  %v789 = vrot.slane %v788, 2
  %v790 = vadd.f32 %v788, %v789
  %v791 = vrot.slane %v790, 1
  %v792 = vadd.f32 %v790, %v791
  %v793 = vmul.f32 %v155, %v746
  %v794 = vmul.f32 %v156, %v751
  %v795 = vadd.f32 %v793, %v794
  %v796 = vrot.slane %v795, 4
  %v797 = vadd.f32 %v795, %v796
  %v798 = vrot.slane %v797, 2
  %v799 = vadd.f32 %v797, %v798
  %v800 = vrot.slane %v799, 1
  %v801 = vadd.f32 %v799, %v800
  %v802 = vmul.f32 %v764, %v736
  %v803 = vmul.f32 %v765, %v741
  %v804 = vadd.f32 %v802, %v803
  %v805 = vrot.slane %v804, 4
  %v806 = vadd.f32 %v804, %v805
  %v807 = vrot.slane %v806, 2
  %v808 = vadd.f32 %v806, %v807
  %v809 = vrot.slane %v808, 1
  %v810 = vadd.f32 %v808, %v809
  %v811 = vmul.f32 %v155, %v756
  %v812 = vmul.f32 %v156, %v761
  %v813 = vadd.f32 %v811, %v812
  %v814 = vrot.slane %v813, 4
  %v815 = vadd.f32 %v813, %v814
  %v816 = vrot.slane %v815, 2
  %v817 = vadd.f32 %v815, %v816
  %v818 = vrot.slane %v817, 1
  %v819 = vadd.f32 %v817, %v818
  %v820 = vmul.f32 %v774, %v43
  %v821 = vsub.f32 %v792, %v820
  %v822 = vmul.f32 %v821, 1024.0
  %v823 = vmul.f32 %v774, %v44
  %v824 = vsub.f32 %v801, %v823
  %v825 = vmul.f32 %v824, 1024.0
  %v826 = vmul.f32 %v783, %v43
  %v827 = vsub.f32 %v810, %v826
  %v828 = vmul.f32 %v827, 1024.0
  %v829 = vmul.f32 %v783, %v44
  %v830 = vsub.f32 %v819, %v829
  %v831 = vmul.f32 %v830, 1024.0
  %v832 = vmul.f32 %v774, 0.0001
  %v833 = vadd.f32 %v43, %v832
  %v834 = vmul.f32 %v783, 0.0001
  %v835 = vadd.f32 %v44, %v834
  %v836 = vlaneseq
  %v837 = vshrl.u32 %v836, 7
  %v838 = vsub.s32 0, %v837
  %v839 = vrot.slane %v833, %v838
  %vm840 = vcmp.eq.s32.totalorder %v33, 1
  %v841 = vlaneseq
  %v842 = vshrl.u32 %v841, 7
  %v843 = vsub.s32 0, %v842
  %v844 = vrot.slane %v835, %v843
  %v845 = vsel %vm840, %v844, %v839
  %846 = vst [vmem:[%s6] sm:$0x3] %v845
  %v847 = vsel %vm840, %v783, %v774
  %848 = vst [vmem:[%s7] sm:$0x3] %v847
  %v849 = vlaneseq
  %v850 = vshrl.u32 %v849, 7
  %v851 = vsub.s32 0, %v850
  %v852 = vrot.slane %v822, %v851
  %v853 = vlaneseq
  %v854 = vshrl.u32 %v853, 7
  %v855 = vsub.s32 0, %v854
  %v856 = vrot.slane %v825, %v855
  %v857 = vsel %vm840, %v856, %v852
  %vm858 = vcmp.eq.s32.totalorder %v33, 2
  %v859 = vlaneseq
  %v860 = vshrl.u32 %v859, 7
  %v861 = vsub.s32 0, %v860
  %v862 = vrot.slane %v828, %v861
  %v863 = vsel %vm858, %v862, %v857
  %vm864 = vcmp.eq.s32.totalorder %v33, 3
  %v865 = vlaneseq
  %v866 = vshrl.u32 %v865, 7
  %v867 = vsub.s32 0, %v866
  %v868 = vrot.slane %v831, %v867
  %v869 = vsel %vm864, %v868, %v863
  %870 = vst [vmem:[%s8] sm:$0xf] %v869
  %v872 = vlaneseq
  %v873 = vshrl.u32 %v872, 7
  %v874 = vsub.s32 0, %v873
  %v875 = vrot.slane %v326, %v874
  %v878 = vlaneseq
  %v879 = vshrl.u32 %v878, 7
  %v880 = vsub.s32 0, %v879
  %v881 = vrot.slane %v328, %v880
  %v883 = vsel %vm840, %v881, %v875
  %v885 = vlaneseq
  %v886 = vshrl.u32 %v885, 7
  %v887 = vsub.s32 0, %v886
  %v888 = vrot.slane %v330, %v887
  %v890 = vsel %vm858, %v888, %v883
  %v892 = vlaneseq
  %v893 = vshrl.u32 %v892, 7
  %v894 = vsub.s32 0, %v893
  %v895 = vrot.slane %v332, %v894
  %v897 = vsel %vm864, %v895, %v890
  %898 = vst [vmem:[%s9] sm:$0xf] %v897
  %899 = vst [vmem:[%s10] sm:$0x1] %v298
  // Predicated region
  $region26: #{mpm_step.1} parent=0 // pred_check
    _
  $region27: #{mpm_step.1} parent=0 // pred_check_branch
    %901 = sbr.rel (0) target = $region29
  $region28: #{mpm_step.1} parent=0 // pred_region
    _
  $region29: #{mpm_step.1} parent=0 // pred_fallthru
    _
  // Predicated region
  $region30: #{mpm_step.1} parent=0 // pred_check
    _
  $region31: #{mpm_step.1} parent=0 // pred_check_branch
    %903 = sbr.rel (0) target = $region33
  $region32: #{mpm_step.1} parent=0 // pred_region
    _
  $region33: #{mpm_step.1} parent=0 // pred_fallthru
    _
  // Predicated region
  $region34: #{mpm_step.1} parent=0 // pred_check
    _
  $region35: #{mpm_step.1} parent=0 // pred_check_branch
    %905 = sbr.rel (0) target = $region37
  $region36: #{mpm_step.1} parent=0 // pred_region
    _
  $region37: #{mpm_step.1} parent=0 // pred_fallthru
    _
  // Predicated region
  $region38: #{mpm_step.1} parent=0 // pred_check
    _
  $region39: #{mpm_step.1} parent=0 // pred_check_branch
    %907 = sbr.rel (0) target = $region41
  $region40: #{mpm_step.1} parent=0 // pred_region
    _
  $region41: #{mpm_step.1} parent=0 // pred_fallthru
    _
  // Predicated region
  $region42: #{mpm_step.1} parent=0 // pred_check
    _
  $region43: #{mpm_step.1} parent=0 // pred_check_branch
    %909 = sbr.rel (0) target = $region45
  $region44: #{mpm_step.1} parent=0 // pred_region
    _
  $region45: #{mpm_step.1} parent=0 // pred_fallthru
    _
  // Predicated region
  $region46: #{mpm_step.1} parent=0 // pred_check
    _
  $region47: #{mpm_step.1} parent=0 // pred_check_branch
    %911 = sbr.rel (0) target = $region49
  $region48: #{mpm_step.1} parent=0 // pred_region
    _
  $region49: #{mpm_step.1} parent=0 // pred_fallthru
    _
  // Predicated region
  $region50: #{mpm_step.1} parent=0 // pred_check
    _
  $region51: #{mpm_step.1} parent=0 // pred_check_branch
    %913 = sbr.rel (0) target = $region53
  $region52: #{mpm_step.1} parent=0 // pred_region
    _
  $region53: #{mpm_step.1} parent=0 // pred_fallthru
    _
  // Predicated region
  $region54: #{mpm_step.1} parent=0 // pred_check
    _
  $region55: #{mpm_step.1} parent=0 // pred_check_branch
    %915 = sbr.rel (0) target = $region57
  $region56: #{mpm_step.1} parent=0 // pred_region
    _
  $region57: #{mpm_step.1} parent=0 // pred_fallthru
    _
  // Predicated region
  $region58: #{mpm_step.1} parent=0 // pred_check
    _
  $region59: #{mpm_step.1} parent=0 // pred_check_branch
    %917 = sbr.rel (0) target = $region61
  $region60: #{mpm_step.1} parent=0 // pred_region
    _
  $region61: #{mpm_step.1} parent=0 // pred_fallthru
    _
  // Predicated region
  $region62: #{mpm_step.1} parent=0 // pred_check
    _
  $region63: #{mpm_step.1} parent=0 // pred_check_branch
    %919 = sbr.rel (0) target = $region65
  $region64: #{mpm_step.1} parent=0 // pred_region
    _
  $region65: #{mpm_step.1} parent=0 // pred_fallthru
    _

</llo_original>
